<compile_context>
chip_gen: v7x
topology: tpu7x:2x2x1
jax: 0.10.0
libtpu: 0.0.40
codegen_flags: <defaults>
</compile_context>

<pallas_src>
import functools

import jax
import jax.numpy as jnp
from jax.experimental import pallas as pl
from jax.experimental.pallas import tpu as pltpu


NUM_CLASSES = 10
PAD_CLASSES = 128  # lane-dense padded width for the final layer


def _round_up(x, m):
    return (x + m - 1) // m * m


# ---------------------------------------------------------------------------
# Fused kernel: 3x (matmul + bias + ReLU) + masked softmax, all in VMEM
# ---------------------------------------------------------------------------
def mlp_fused_kernel(x_ref, w1_ref, b1_ref, w2_ref, b2_ref, w3_ref, b3_ref,
                     h1_ref, h2_ref, h3_ref, out_ref, *, n_classes):
    # In-kernel cast to bf16 (VPU has slack; saves a wrapper-side HBM pass).
    x_bf = x_ref[...].astype(jnp.bfloat16)

    # Layer 1: 784 -> 512   (bf16 inputs, fp32 MXU accumulate)
    y1 = jnp.dot(x_bf, w1_ref[...], preferred_element_type=jnp.float32)
    y1 = jnp.maximum(y1 + b1_ref[...], 0.0)
    y1_bf = y1.astype(jnp.bfloat16)
    h1_ref[...] = y1_bf.astype(h1_ref.dtype)

    # Layer 2: 512 -> 256
    y2 = jnp.dot(y1_bf, w2_ref[...], preferred_element_type=jnp.float32)
    y2 = jnp.maximum(y2 + b2_ref[...], 0.0)
    y2_bf = y2.astype(jnp.bfloat16)
    h2_ref[...] = y2_bf.astype(h2_ref.dtype)

    # Layer 3: 256 -> 128 (lane-padded; real classes are [:, :n_classes])
    y3 = jnp.dot(y2_bf, w3_ref[...], preferred_element_type=jnp.float32)
    y3 = jnp.maximum(y3 + b3_ref[...], 0.0)
    h3_ref[...] = y3.astype(h3_ref.dtype)

    # Softmax over the real class lanes only (pad lanes masked to -inf).
    lane = jax.lax.broadcasted_iota(jnp.int32, y3.shape, 1)
    logits = jnp.where(lane < n_classes, y3, -jnp.inf)
    m = jnp.max(logits, axis=-1, keepdims=True)
    e = jnp.exp(logits - m)
    s = jnp.sum(e, axis=-1, keepdims=True)
    out_ref[...] = (e / s).astype(out_ref.dtype)  # exact divide (free here)


# ---------------------------------------------------------------------------
# Tile / VMEM budget selection (generation-aware, but safe everywhere)
# ---------------------------------------------------------------------------
def _pick_tile_and_vmem(batch):
    tb_max = 1024
    vmem_limit = 48 * 1024 * 1024          # safe on v7x (64 MiB physical)
    try:
        cap = pltpu.get_tpu_info().vmem_capacity_bytes
        if cap >= 100 * 1024 * 1024:       # v5e / v6e: 128 MiB VMEM
            tb_max = 2048
            vmem_limit = 80 * 1024 * 1024
    except Exception:
        pass
    # Cap tile at ceil(B/2) so a large batch always yields >= 2 grid steps
    # (lets the "parallel" axis use both v7x TensorCores; harmless elsewhere).
    half = _round_up(max(pl.cdiv(batch, 2), 1), 16)
    tb = min(tb_max, half)
    return tb, vmem_limit


# ---------------------------------------------------------------------------
# Wrapper
# ---------------------------------------------------------------------------
def mlp_forward(x, params):
    """Mirrors Mlp.forward(x, cond_drop=False). Returns (softmax_out, hs)."""
    (w1, b1), (w2, b2), (w3, b3) = params
    B, f_in = x.shape
    d1 = w1.shape[1]
    d2 = w2.shape[1]
    n_cls = w3.shape[1]

    # Pad last layer to a lane-dense width (zero weights / zero bias); the
    # padded lanes are masked out of the softmax inside the kernel.
    w3p = jnp.zeros((d2, PAD_CLASSES), w3.dtype).at[:, :n_cls].set(w3)
    b3p = jnp.zeros((PAD_CLASSES,), b3.dtype).at[:n_cls].set(b3)

    tb, vmem_limit = _pick_tile_and_vmem(B)
    bp = _round_up(B, tb)
    x_in = x.astype(jnp.float32)
    if bp != B:
        # Single pad pass (no separate cast pass); kernel casts to bf16.
        x_in = jnp.zeros((bp, f_in), jnp.float32).at[:B].set(x_in)

    kern = functools.partial(mlp_fused_kernel, n_classes=n_cls)

    h1, h2, h3p, outp = pl.pallas_call(
        kern,
        out_shape=(
            jax.ShapeDtypeStruct((bp, d1), jnp.bfloat16),         # h1
            jax.ShapeDtypeStruct((bp, d2), jnp.bfloat16),         # h2
            jax.ShapeDtypeStruct((bp, PAD_CLASSES), jnp.bfloat16),  # h3 (padded)
            jax.ShapeDtypeStruct((bp, PAD_CLASSES), jnp.float32),   # softmax out
        ),
        grid=(bp // tb,),
        in_specs=[
            pl.BlockSpec((tb, f_in), lambda i: (i, 0)),          # x tile (streamed)
            pl.BlockSpec((f_in, d1), lambda i: (0, 0)),          # W1 (resident)
            pl.BlockSpec((1, d1), lambda i: (0, 0)),             # b1
            pl.BlockSpec((d1, d2), lambda i: (0, 0)),            # W2 (resident)
            pl.BlockSpec((1, d2), lambda i: (0, 0)),             # b2
            pl.BlockSpec((d2, PAD_CLASSES), lambda i: (0, 0)),   # W3 (padded, resident)
            pl.BlockSpec((1, PAD_CLASSES), lambda i: (0, 0)),    # b3 (padded)
        ],
        out_specs=(
            pl.BlockSpec((tb, d1), lambda i: (i, 0)),
            pl.BlockSpec((tb, d2), lambda i: (i, 0)),
            pl.BlockSpec((tb, PAD_CLASSES), lambda i: (i, 0)),
            pl.BlockSpec((tb, PAD_CLASSES), lambda i: (i, 0)),
        ),
        compiler_params=pltpu.CompilerParams(
            dimension_semantics=("parallel",),
            vmem_limit_bytes=vmem_limit,
        ),
    )(x_in, w1, b1.reshape(1, d1), w2, b2.reshape(1, d2),
      w3p, b3p.reshape(1, PAD_CLASSES))

    h1 = h1[:B]
    h2 = h2[:B]
    h3 = h3p[:B, :n_cls]
    out = outp[:B, :n_cls]
    # NOTE: hs[1:] are bf16 (intentional mixed precision); hs[0] is the
    # original x unchanged.
    return out, [x, h1, h2, h3]


# ---------------------------------------------------------------------------
# Deterministic parameter init (matches nn.Linear shapes: 784->512->256->10).
# Weights stored pre-transposed [in, out] in bf16; biases fp32.
# ---------------------------------------------------------------------------
def init_params(key):
    dims = [(28 * 28, 512), (512, 256), (256, NUM_CLASSES)]
    params = []
    for (f_in, f_out) in dims:
        key, kw, kb = jax.random.split(key, 3)
        bound = 1.0 / jnp.sqrt(f_in)
        w = jax.random.uniform(kw, (f_in, f_out), jnp.float32, -bound, bound)
        b = jax.random.uniform(kb, (f_out,), jnp.float32, -bound, bound)
        params.append((w.astype(jnp.bfloat16), b))
    return params


if __name__ == "__main__":
    key = jax.random.PRNGKey(0)
    kx, kp = jax.random.split(key)

    B = 4
    x = jax.random.normal(kx, (B, 28 * 28), jnp.float32)
    params = init_params(kp)

    out, hs = mlp_forward(x, params)
    jax.block_until_ready(out)
    for h in hs:
        jax.block_until_ready(h)

    # Sanity check vs pure-JAX reference with identical bf16/fp32 mixed precision.
    h_ref = x
    hs_ref = [x]
    for (w, b) in params:
        h_ref = jnp.maximum(
            jnp.dot(h_ref.astype(jnp.bfloat16), w,
                    preferred_element_type=jnp.float32) + b, 0.0)
        hs_ref.append(h_ref)
    ref_out = jax.nn.softmax(h_ref, axis=1)

    assert out.shape == (B, NUM_CLASSES)
    assert len(hs) == 4
    assert hs[1].shape == (B, 512)
    assert hs[2].shape == (B, 256)
    assert hs[3].shape == (B, NUM_CLASSES)
    assert jnp.allclose(hs[1].astype(jnp.float32), hs_ref[1],
                        atol=5e-2, rtol=5e-2), "h1 mismatch"
    assert jnp.allclose(hs[2].astype(jnp.float32), hs_ref[2],
                        atol=5e-2, rtol=5e-2), "h2 mismatch"
    assert jnp.allclose(hs[3].astype(jnp.float32), hs_ref[3],
                        atol=5e-2, rtol=5e-2), "h3 mismatch"
    assert jnp.allclose(out, ref_out, atol=1e-2), "softmax mismatch vs reference"
    assert jnp.allclose(jnp.sum(out, axis=1), 1.0, atol=1e-3), "softmax not normalized"

    print("KERNEL_OK")
</pallas_src>

<mosaic_0001>
module attributes {stable_mosaic.version = 11 : i64} {
  func.func @mlp_fused_kernel(%arg0: i32, %arg1: memref<16x784xf32, #tpu.memory_space<vmem>>, %arg2: memref<784x512xbf16, #tpu.memory_space<vmem>>, %arg3: memref<1x512xf32, #tpu.memory_space<vmem>>, %arg4: memref<512x256xbf16, #tpu.memory_space<vmem>>, %arg5: memref<1x256xf32, #tpu.memory_space<vmem>>, %arg6: memref<256x128xbf16, #tpu.memory_space<vmem>>, %arg7: memref<1x128xf32, #tpu.memory_space<vmem>>, %arg8: memref<16x512xbf16, #tpu.memory_space<vmem>>, %arg9: memref<16x256xbf16, #tpu.memory_space<vmem>>, %arg10: memref<16x128xbf16, #tpu.memory_space<vmem>>, %arg11: memref<16x128xf32, #tpu.memory_space<vmem>>) attributes {dimension_semantics = [#tpu.dimension_semantics<parallel>], iteration_bounds = array<i64: 1>, scalar_prefetch = 0 : i64, scratch_operands = 0 : i64, tpu.core_type = #tpu.core_type<tc>, window_params = [{transform_indices = @transform_0, window_bounds = array<i64: 16, 784>}, {pipeline_mode = #tpu.pipeline_mode<synchronous>, transform_indices = @transform_1, window_bounds = array<i64: 784, 512>}, {pipeline_mode = #tpu.pipeline_mode<synchronous>, transform_indices = @transform_2, window_bounds = array<i64: 1, 512>}, {pipeline_mode = #tpu.pipeline_mode<synchronous>, transform_indices = @transform_3, window_bounds = array<i64: 512, 256>}, {pipeline_mode = #tpu.pipeline_mode<synchronous>, transform_indices = @transform_4, window_bounds = array<i64: 1, 256>}, {pipeline_mode = #tpu.pipeline_mode<synchronous>, transform_indices = @transform_5, window_bounds = array<i64: 256, 128>}, {pipeline_mode = #tpu.pipeline_mode<synchronous>, transform_indices = @transform_6, window_bounds = array<i64: 1, 128>}, {transform_indices = @transform_7, window_bounds = array<i64: 16, 512>}, {transform_indices = @transform_8, window_bounds = array<i64: 16, 256>}, {transform_indices = @transform_9, window_bounds = array<i64: 16, 128>}, {transform_indices = @transform_10, window_bounds = array<i64: 16, 128>}]} {
    %c0 = arith.constant 0 : index
    %c0_0 = arith.constant 0 : index
    %0 = vector.load %arg1[%c0, %c0_0] : memref<16x784xf32, #tpu.memory_space<vmem>>, vector<16x784xf32>
    %1 = arith.truncf %0 : vector<16x784xf32> to vector<16x784xbf16>
    %c0_1 = arith.constant 0 : index
    %c0_2 = arith.constant 0 : index
    %2 = vector.load %arg2[%c0_1, %c0_2] : memref<784x512xbf16, #tpu.memory_space<vmem>>, vector<784x512xbf16>
    %cst = arith.constant dense<0.000000e+00> : vector<16x512xf32>
    %3 = tpu.matmul %1, %2, %cst {dimension_numbers = #tpu.dot_dimension_numbers<[1], [0], [0], [1], [0, 0, 1, 1], [], []>} : vector<16x784xbf16>, vector<784x512xbf16>, vector<16x512xf32> -> vector<16x512xf32>
    %c0_3 = arith.constant 0 : index
    %c0_4 = arith.constant 0 : index
    %4 = vector.load %arg3[%c0_3, %c0_4] : memref<1x512xf32, #tpu.memory_space<vmem>>, vector<1x512xf32>
    %5 = vector.broadcast %4 : vector<1x512xf32> to vector<16x512xf32>
    %6 = arith.addf %3, %5 : vector<16x512xf32>
    %cst_5 = arith.constant 0.000000e+00 : f32
    %7 = vector.broadcast %cst_5 : f32 to vector<16x512xf32>
    %8 = arith.maximumf %6, %7 : vector<16x512xf32>
    %9 = arith.truncf %8 : vector<16x512xf32> to vector<16x512xbf16>
    %c0_6 = arith.constant 0 : index
    %c0_7 = arith.constant 0 : index
    %10 = vector.load %arg8[%c0_6, %c0_7] : memref<16x512xbf16, #tpu.memory_space<vmem>>, vector<16x512xbf16>
    tpu.vector_store %arg8[%c0_6, %c0_7], %9 {strides = array<i32>} : memref<16x512xbf16, #tpu.memory_space<vmem>>, vector<16x512xbf16>,
    %c0_8 = arith.constant 0 : index
    %c0_9 = arith.constant 0 : index
    %11 = vector.load %arg4[%c0_8, %c0_9] : memref<512x256xbf16, #tpu.memory_space<vmem>>, vector<512x256xbf16>
    %cst_10 = arith.constant dense<0.000000e+00> : vector<16x256xf32>
    %12 = tpu.matmul %9, %11, %cst_10 {dimension_numbers = #tpu.dot_dimension_numbers<[1], [0], [0], [1], [0, 0, 1, 1], [], []>} : vector<16x512xbf16>, vector<512x256xbf16>, vector<16x256xf32> -> vector<16x256xf32>
    %c0_11 = arith.constant 0 : index
    %c0_12 = arith.constant 0 : index
    %13 = vector.load %arg5[%c0_11, %c0_12] : memref<1x256xf32, #tpu.memory_space<vmem>>, vector<1x256xf32>
    %14 = vector.broadcast %13 : vector<1x256xf32> to vector<16x256xf32>
    %15 = arith.addf %12, %14 : vector<16x256xf32>
    %cst_13 = arith.constant 0.000000e+00 : f32
    %16 = vector.broadcast %cst_13 : f32 to vector<16x256xf32>
    %17 = arith.maximumf %15, %16 : vector<16x256xf32>
    %18 = arith.truncf %17 : vector<16x256xf32> to vector<16x256xbf16>
    %c0_14 = arith.constant 0 : index
    %c0_15 = arith.constant 0 : index
    %19 = vector.load %arg9[%c0_14, %c0_15] : memref<16x256xbf16, #tpu.memory_space<vmem>>, vector<16x256xbf16>
    tpu.vector_store %arg9[%c0_14, %c0_15], %18 {strides = array<i32>} : memref<16x256xbf16, #tpu.memory_space<vmem>>, vector<16x256xbf16>,
    %c0_16 = arith.constant 0 : index
    %c0_17 = arith.constant 0 : index
    %20 = vector.load %arg6[%c0_16, %c0_17] : memref<256x128xbf16, #tpu.memory_space<vmem>>, vector<256x128xbf16>
    %cst_18 = arith.constant dense<0.000000e+00> : vector<16x128xf32>
    %21 = tpu.matmul %18, %20, %cst_18 {dimension_numbers = #tpu.dot_dimension_numbers<[1], [0], [0], [1], [0, 0, 1, 1], [], []>} : vector<16x256xbf16>, vector<256x128xbf16>, vector<16x128xf32> -> vector<16x128xf32>
    %c0_19 = arith.constant 0 : index
    %c0_20 = arith.constant 0 : index
    %22 = vector.load %arg7[%c0_19, %c0_20] : memref<1x128xf32, #tpu.memory_space<vmem>>, vector<1x128xf32>
    %23 = vector.broadcast %22 : vector<1x128xf32> to vector<16x128xf32>
    %24 = arith.addf %21, %23 : vector<16x128xf32>
    %cst_21 = arith.constant 0.000000e+00 : f32
    %25 = vector.broadcast %cst_21 : f32 to vector<16x128xf32>
    %26 = arith.maximumf %24, %25 : vector<16x128xf32>
    %27 = arith.truncf %26 : vector<16x128xf32> to vector<16x128xbf16>
    %c0_22 = arith.constant 0 : index
    %c0_23 = arith.constant 0 : index
    %28 = vector.load %arg10[%c0_22, %c0_23] : memref<16x128xbf16, #tpu.memory_space<vmem>>, vector<16x128xbf16>
    tpu.vector_store %arg10[%c0_22, %c0_23], %27 {strides = array<i32>} : memref<16x128xbf16, #tpu.memory_space<vmem>>, vector<16x128xbf16>,
    %29 = tpu.iota {dimensions = array<i32: 1>} : vector<16x128xi32>
    %c10_i32 = arith.constant 10 : i32
    %30 = vector.broadcast %c10_i32 : i32 to vector<16x128xi32>
    %31 = arith.cmpi slt, %29, %30 : vector<16x128xi32>
    %cst_24 = arith.constant 0xFF800000 : f32
    %32 = vector.broadcast %cst_24 : f32 to vector<16x128xf32>
    %33 = arith.select %31, %26, %32 : vector<16x128xi1>, vector<16x128xf32>
    %cst_25 = arith.constant dense<0xFF800000> : vector<16xf32>
    %34 = vector.multi_reduction <maximumf>, %33, %cst_25 [1] : vector<16x128xf32> to vector<16xf32>
    %35 = vector.shape_cast %34 : vector<16xf32> to vector<16x1xf32>
    %36 = vector.broadcast %35 : vector<16x1xf32> to vector<16x128xf32>
    %37 = arith.subf %33, %36 : vector<16x128xf32>
    %38 = math.exp %37 : vector<16x128xf32>
    %cst_26 = arith.constant dense<0.000000e+00> : vector<16xf32>
    %39 = vector.multi_reduction <add>, %38, %cst_26 [1] : vector<16x128xf32> to vector<16xf32>
    %40 = vector.shape_cast %39 : vector<16xf32> to vector<16x1xf32>
    %41 = vector.broadcast %40 : vector<16x1xf32> to vector<16x128xf32>
    %42 = arith.divf %38, %41 : vector<16x128xf32>
    %c0_27 = arith.constant 0 : index
    %c0_28 = arith.constant 0 : index
    %43 = vector.load %arg11[%c0_27, %c0_28] : memref<16x128xf32, #tpu.memory_space<vmem>>, vector<16x128xf32>
    tpu.vector_store %arg11[%c0_27, %c0_28], %42 {strides = array<i32>} : memref<16x128xf32, #tpu.memory_space<vmem>>, vector<16x128xf32>,
    return
  }
  func.func @transform_0(%arg0: i32) -> (i32, i32) {
    %c0_i32 = arith.constant 0 : i32
    %c0_i32_0 = arith.constant 0 : i32
    return %arg0, %c0_i32 : i32, i32
  }
  func.func @transform_1(%arg0: i32) -> (i32, i32) {
    %c0_i32 = arith.constant 0 : i32
    %c0_i32_0 = arith.constant 0 : i32
    %c0_i32_1 = arith.constant 0 : i32
    return %c0_i32, %c0_i32_0 : i32, i32
  }
  func.func @transform_2(%arg0: i32) -> (i32, i32) {
    %c0_i32 = arith.constant 0 : i32
    %c0_i32_0 = arith.constant 0 : i32
    %c0_i32_1 = arith.constant 0 : i32
    return %c0_i32, %c0_i32_0 : i32, i32
  }
  func.func @transform_3(%arg0: i32) -> (i32, i32) {
    %c0_i32 = arith.constant 0 : i32
    %c0_i32_0 = arith.constant 0 : i32
    %c0_i32_1 = arith.constant 0 : i32
    return %c0_i32, %c0_i32_0 : i32, i32
  }
  func.func @transform_4(%arg0: i32) -> (i32, i32) {
    %c0_i32 = arith.constant 0 : i32
    %c0_i32_0 = arith.constant 0 : i32
    %c0_i32_1 = arith.constant 0 : i32
    return %c0_i32, %c0_i32_0 : i32, i32
  }
  func.func @transform_5(%arg0: i32) -> (i32, i32) {
    %c0_i32 = arith.constant 0 : i32
    %c0_i32_0 = arith.constant 0 : i32
    %c0_i32_1 = arith.constant 0 : i32
    return %c0_i32, %c0_i32_0 : i32, i32
  }
  func.func @transform_6(%arg0: i32) -> (i32, i32) {
    %c0_i32 = arith.constant 0 : i32
    %c0_i32_0 = arith.constant 0 : i32
    %c0_i32_1 = arith.constant 0 : i32
    return %c0_i32, %c0_i32_0 : i32, i32
  }
  func.func @transform_7(%arg0: i32) -> (i32, i32) {
    %c0_i32 = arith.constant 0 : i32
    %c0_i32_0 = arith.constant 0 : i32
    return %arg0, %c0_i32 : i32, i32
  }
  func.func @transform_8(%arg0: i32) -> (i32, i32) {
    %c0_i32 = arith.constant 0 : i32
    %c0_i32_0 = arith.constant 0 : i32
    return %arg0, %c0_i32 : i32, i32
  }
  func.func @transform_9(%arg0: i32) -> (i32, i32) {
    %c0_i32 = arith.constant 0 : i32
    %c0_i32_0 = arith.constant 0 : i32
    return %arg0, %c0_i32 : i32, i32
  }
  func.func @transform_10(%arg0: i32) -> (i32, i32) {
    %c0_i32 = arith.constant 0 : i32
    %c0_i32_0 = arith.constant 0 : i32
    return %arg0, %c0_i32 : i32, i32
  }
}

</mosaic_0001>

<llo_original>
// kernel: tpu_custom_call.1
$region0: #{tpu_custom_call.1}
  #allocation0 [shape = 'u32[]', space=smem, size = 0x4, offset = 0x4, fixed_abs, tag = 'smem constant byte address 0x4 - core index']
  #allocation1 [shape = 'u32[144,128]{1,0:T(1,128)}', space=vmem, size = 0x12000, scoped, tag = 'internal scratch']
  %s0 = inlined_call_operand.hbm [shape: f32[16,784], index: 0, kind: input, shape index: {}]
  %s1 = inlined_call_operand.hbm [shape: bf16[784,512], index: 1, kind: input, shape index: {}]
  %s2 = inlined_call_operand.vmem [shape: f32[1,512], index: 2, kind: input, shape index: {}]
  %s3 = inlined_call_operand.hbm [shape: bf16[512,256], index: 3, kind: input, shape index: {}]
  %s4 = inlined_call_operand.vmem [shape: f32[1,256], index: 4, kind: input, shape index: {}]
  %s5 = inlined_call_operand.hbm [shape: bf16[256,128], index: 5, kind: input, shape index: {}]
  %s6 = inlined_call_operand.vmem [shape: f32[1,128], index: 6, kind: input, shape index: {}]
  %s7 = inlined_call_operand.hbm [shape: bf16[16,512], index: 7, kind: output, shape index: {0}]
  %s8 = inlined_call_operand.hbm [shape: bf16[16,256], index: 8, kind: output, shape index: {1}]
  %s9 = inlined_call_operand.hbm [shape: bf16[16,128], index: 9, kind: output, shape index: {2}]
  %s10 = inlined_call_operand.hbm [shape: f32[16,128], index: 10, kind: output, shape index: {3}]
  %11 = xla_tuple %s7, %s8, %s9, %s10
  %s12 = sld [smem:[#allocation0]]
  $region78: #{tpu_custom_call.1} parent=0
    _
  %s14 = ssub.s32 1, %s12
  %s15 = scalar_select 0, %s14, %s12
  $region1: #{tpu_custom_call.1} parent=0
    #allocation2 [shape = 'u8[57344]{0}', space=vmem, size = 0xe000, scoped, tag = 'input window, operand 0, single buffered']
    #allocation3 [shape = 's32[1]{0}', space=sflag, size = 0x4, scoped, tag = 'scoped memory for tpu_custom_call.1']
    #allocation4 [shape = 's32[1]{0}', space=sflag, size = 0x4, scoped, tag = 'scoped memory for tpu_custom_call.1']
    #allocation5 [shape = 'u8[802816]{0}', space=vmem, size = 0xc4000, scoped, tag = 'input window, operand 1, single buffered']
    #allocation6 [shape = 's32[1]{0}', space=sflag, size = 0x4, scoped, tag = 'scoped memory for tpu_custom_call.1']
    #allocation7 [shape = 'u8[262144]{0}', space=vmem, size = 0x40000, scoped, tag = 'input window, operand 3, single buffered']
    #allocation8 [shape = 'u8[65536]{0}', space=vmem, size = 0x10000, scoped, tag = 'input window, operand 5, single buffered']
    #allocation9 [shape = 's32[1]{0}', space=sflag, size = 0x4, scoped, tag = 'scoped memory for tpu_custom_call.1']
    #allocation10 [shape = 'u8[16384]{0}', space=vmem, size = 0x4000, scoped, tag = 'output window, operand 0, single buffered']
    #allocation11 [shape = 'u8[8192]{0}', space=vmem, size = 0x2000, scoped, tag = 'output window, operand 1, single buffered']
    #allocation12 [shape = 's32[1]{0}', space=sflag, size = 0x4, scoped, tag = 'scoped memory for tpu_custom_call.1']
    #allocation13 [shape = 'u8[4096]{0}', space=vmem, size = 0x1000, scoped, tag = 'output window, operand 2, single buffered']
    #allocation14 [shape = 'u8[8192]{0}', space=vmem, size = 0x2000, scoped, tag = 'output window, operand 3, single buffered']
    #allocation15 [shape = 's32[1]{0}', space=sflag, size = 0x4, scoped, tag = 'scoped memory for tpu_custom_call.1']
    %16 = vsyncpa [#allocation3], 0
    %17 = vsyncpa [#allocation6], 0
    %18 = vsyncpa [#allocation9], 0
    %19 = vsyncpa [#allocation4], 0
    %20 = vsyncpa [#allocation12], 0
    %21 = vsyncpa [#allocation15], 0
    // Predicated region
    $region2: #{tpu_custom_call.1} parent=1 // pred_check
      _
    $region3: #{tpu_custom_call.1} parent=1 // pred_check_branch
      %23 = sbr.rel (0) target = $region5
    $region4: #{tpu_custom_call.1} parent=1 // pred_region
      %s25 = ssub.s32 1792, 1792
      %26 = vsyncadd [#allocation3], %s25
      %s27 = sshll.u32 [#allocation2], 4
      %s28 = int_to_ptr.vmem [resolvable:$true] %s27
      %33 = dma.hbm_to_vmem [thread:$0]  %s0, 1792, %s28, [#allocation3], 896, 896, 56
    $region5: #{tpu_custom_call.1} parent=1 // pred_fallthru
      _
    // Predicated region
    $region6: #{tpu_custom_call.1} parent=1 // pred_check
      _
    $region7: #{tpu_custom_call.1} parent=1 // pred_check_branch
      %35 = sbr.rel (0) target = $region9
    $region8: #{tpu_custom_call.1} parent=1 // pred_region
      %s37 = ssub.s32 25088, 25088
      %38 = vsyncadd [#allocation6], %s37
      %s39 = sshll.u32 [#allocation5], 4
      %s40 = int_to_ptr.vmem [resolvable:$true] %s39
      %45 = dma.hbm_to_vmem [thread:$0]  %s1, 25088, %s40, [#allocation6], 256, 256, 16
    $region9: #{tpu_custom_call.1} parent=1 // pred_fallthru
      _
    // Predicated region
    $region10: #{tpu_custom_call.1} parent=1 // pred_check
      _
    $region11: #{tpu_custom_call.1} parent=1 // pred_check_branch
      %47 = sbr.rel (0) target = $region13
    $region12: #{tpu_custom_call.1} parent=1 // pred_region
      _
    $region13: #{tpu_custom_call.1} parent=1 // pred_fallthru
      _
    // Predicated region
    $region14: #{tpu_custom_call.1} parent=1 // pred_check
      _
    $region15: #{tpu_custom_call.1} parent=1 // pred_check_branch
      %49 = sbr.rel (0) target = $region17
    $region16: #{tpu_custom_call.1} parent=1 // pred_region
      %s51 = ssub.s32 8192, 8192
      %52 = vsyncadd [#allocation6], %s51
      %s53 = sshll.u32 [#allocation7], 4
      %s54 = int_to_ptr.vmem [resolvable:$true] %s53
      %59 = dma.hbm_to_vmem [thread:$0]  %s3, 8192, %s54, [#allocation6], 128, 128, 8
    $region17: #{tpu_custom_call.1} parent=1 // pred_fallthru
      _
    // Predicated region
    $region18: #{tpu_custom_call.1} parent=1 // pred_check
      _
    $region19: #{tpu_custom_call.1} parent=1 // pred_check_branch
      %61 = sbr.rel (0) target = $region21
    $region20: #{tpu_custom_call.1} parent=1 // pred_region
      _
    $region21: #{tpu_custom_call.1} parent=1 // pred_fallthru
      _
    // Predicated region
    $region22: #{tpu_custom_call.1} parent=1 // pred_check
      _
    $region23: #{tpu_custom_call.1} parent=1 // pred_check_branch
      %63 = sbr.rel (0) target = $region25
    $region24: #{tpu_custom_call.1} parent=1 // pred_region
      %s65 = ssub.s32 2048, 2048
      %66 = vsyncadd [#allocation9], %s65
      %s67 = sshll.u32 [#allocation8], 4
      %s68 = int_to_ptr.vmem [resolvable:$true] %s67
      %73 = dma.hbm_to_vmem [thread:$0]  %s5, 2048, %s68, [#allocation9], 64, 64, 4
    $region25: #{tpu_custom_call.1} parent=1 // pred_fallthru
      _
    // Predicated region
    $region26: #{tpu_custom_call.1} parent=1 // pred_check
      _
    $region27: #{tpu_custom_call.1} parent=1 // pred_check_branch
      %75 = sbr.rel (0) target = $region29
    $region28: #{tpu_custom_call.1} parent=1 // pred_region
      _
    $region29: #{tpu_custom_call.1} parent=1 // pred_fallthru
      _
    // Predicated region
    $region30: #{tpu_custom_call.1} parent=1 // pred_check
      _
    $region31: #{tpu_custom_call.1} parent=1 // pred_check_branch
      %77 = sbr.rel (0) target = $region33
    $region32: #{tpu_custom_call.1} parent=1 // pred_region
      %78 = dma.done [#allocation3], 1792
    $region33: #{tpu_custom_call.1} parent=1 // pred_fallthru
      _
    // Predicated region
    $region34: #{tpu_custom_call.1} parent=1 // pred_check
      _
    $region35: #{tpu_custom_call.1} parent=1 // pred_check_branch
      %80 = sbr.rel (0) target = $region37
    $region36: #{tpu_custom_call.1} parent=1 // pred_region
      %81 = dma.done [#allocation6], 25088
    $region37: #{tpu_custom_call.1} parent=1 // pred_fallthru
      _
    // Predicated region
    $region38: #{tpu_custom_call.1} parent=1 // pred_check
      _
    $region39: #{tpu_custom_call.1} parent=1 // pred_check_branch
      %83 = sbr.rel (0) target = $region41
    $region40: #{tpu_custom_call.1} parent=1 // pred_region
      %84 = dma.done [#allocation6], 8192
    $region41: #{tpu_custom_call.1} parent=1 // pred_fallthru
      _
    // Predicated region
    $region42: #{tpu_custom_call.1} parent=1 // pred_check
      _
    $region43: #{tpu_custom_call.1} parent=1 // pred_check_branch
      %86 = sbr.rel (0) target = $region45
    $region44: #{tpu_custom_call.1} parent=1 // pred_region
      %87 = dma.done [#allocation9], 2048
    $region45: #{tpu_custom_call.1} parent=1 // pred_fallthru
      _
    %v89 = vld [vmem:[#allocation2] sm:$0xff]
    %v90 = vld [vmem:[#allocation2 + $0x8] sm:$0xff]
    %v91 = vld [vmem:[#allocation2 + $0x10] sm:$0xff]
    %v92 = vld [vmem:[#allocation2 + $0x18] sm:$0xff]
    %v93 = vld [vmem:[#allocation2 + $0x20] sm:$0xff]
    %v94 = vld [vmem:[#allocation2 + $0x28] sm:$0xff]
    %v95 = vld [vmem:[#allocation2 + $0x30] sm:$0xff]
    %v96 = vld [vmem:[#allocation2 + $0x38] sm:$0xff]
    %v97 = vld [vmem:[#allocation2 + $0x40] sm:$0xff]
    %v98 = vld [vmem:[#allocation2 + $0x48] sm:$0xff]
    %v99 = vld [vmem:[#allocation2 + $0x50] sm:$0xff]
    %v100 = vld [vmem:[#allocation2 + $0x58] sm:$0xff]
    %v101 = vld [vmem:[#allocation2 + $0x60] sm:$0xff]
    %v102 = vld [vmem:[#allocation2 + $0x68] sm:$0xff]
    %v103 = vpack.c.bf16 %v96, %v89
    %v104 = vpack.c.bf16 %v97, %v90
    %v105 = vpack.c.bf16 %v98, %v91
    %v106 = vpack.c.bf16 %v99, %v92
    %v107 = vpack.c.bf16 %v100, %v93
    %v108 = vpack.c.bf16 %v101, %v94
    %v109 = vpack.c.bf16 %v102, %v95
    %v110 = vld [vmem:[#allocation5] sm:$0xff]
    %v111 = vld [vmem:[#allocation5 + $0x8] sm:$0xff]
    %v112 = vld [vmem:[#allocation5 + $0x10] sm:$0xff]
    %v113 = vld [vmem:[#allocation5 + $0x18] sm:$0xff]
    %v114 = vld [vmem:[#allocation5 + $0x20] sm:$0xff]
    %v115 = vld [vmem:[#allocation5 + $0x28] sm:$0xff]
    %v116 = vld [vmem:[#allocation5 + $0x30] sm:$0xff]
    %v117 = vld [vmem:[#allocation5 + $0x38] sm:$0xff]
    %v118 = vld [vmem:[#allocation5 + $0x40] sm:$0xff]
    %v119 = vld [vmem:[#allocation5 + $0x48] sm:$0xff]
    %v120 = vld [vmem:[#allocation5 + $0x50] sm:$0xff]
    %v121 = vld [vmem:[#allocation5 + $0x58] sm:$0xff]
    %v122 = vld [vmem:[#allocation5 + $0x60] sm:$0xff]
    %v123 = vld [vmem:[#allocation5 + $0x68] sm:$0xff]
    %v124 = vld [vmem:[#allocation5 + $0x70] sm:$0xff]
    %v125 = vld [vmem:[#allocation5 + $0x78] sm:$0xff]
    %v126 = vld [vmem:[#allocation5 + $0x80] sm:$0xff]
    %v127 = vld [vmem:[#allocation5 + $0x88] sm:$0xff]
    %v128 = vld [vmem:[#allocation5 + $0x90] sm:$0xff]
    %v129 = vld [vmem:[#allocation5 + $0x98] sm:$0xff]
    %v130 = vld [vmem:[#allocation5 + $0xa0] sm:$0xff]
    %v131 = vld [vmem:[#allocation5 + $0xa8] sm:$0xff]
    %v132 = vld [vmem:[#allocation5 + $0xb0] sm:$0xff]
    %v133 = vld [vmem:[#allocation5 + $0xb8] sm:$0xff]
    %v134 = vld [vmem:[#allocation5 + $0xc0] sm:$0xff]
    %v135 = vld [vmem:[#allocation5 + $0xc8] sm:$0xff]
    %v136 = vld [vmem:[#allocation5 + $0xd0] sm:$0xff]
    %v137 = vld [vmem:[#allocation5 + $0xd8] sm:$0xff]
    %v138 = vld [vmem:[#allocation5 + $0xe0] sm:$0xff]
    %v139 = vld [vmem:[#allocation5 + $0xe8] sm:$0xff]
    %v140 = vld [vmem:[#allocation5 + $0xf0] sm:$0xff]
    %v141 = vld [vmem:[#allocation5 + $0xf8] sm:$0xff]
    %v142 = vld [vmem:[#allocation5 + $0x100] sm:$0xff]
    %v143 = vld [vmem:[#allocation5 + $0x108] sm:$0xff]
    %v144 = vld [vmem:[#allocation5 + $0x110] sm:$0xff]
    %v145 = vld [vmem:[#allocation5 + $0x118] sm:$0xff]
    %v146 = vld [vmem:[#allocation5 + $0x120] sm:$0xff]
    %v147 = vld [vmem:[#allocation5 + $0x128] sm:$0xff]
    %v148 = vld [vmem:[#allocation5 + $0x130] sm:$0xff]
    %v149 = vld [vmem:[#allocation5 + $0x138] sm:$0xff]
    %v150 = vld [vmem:[#allocation5 + $0x140] sm:$0xff]
    %v151 = vld [vmem:[#allocation5 + $0x148] sm:$0xff]
    %v152 = vld [vmem:[#allocation5 + $0x150] sm:$0xff]
    %v153 = vld [vmem:[#allocation5 + $0x158] sm:$0xff]
    %v154 = vld [vmem:[#allocation5 + $0x160] sm:$0xff]
    %v155 = vld [vmem:[#allocation5 + $0x168] sm:$0xff]
    %v156 = vld [vmem:[#allocation5 + $0x170] sm:$0xff]
    %v157 = vld [vmem:[#allocation5 + $0x178] sm:$0xff]
    %v158 = vld [vmem:[#allocation5 + $0x180] sm:$0xff]
    %v159 = vld [vmem:[#allocation5 + $0x188] sm:$0xff]
    %v160 = vld [vmem:[#allocation5 + $0x190] sm:$0xff]
    %v161 = vld [vmem:[#allocation5 + $0x198] sm:$0xff]
    %v162 = vld [vmem:[#allocation5 + $0x1a0] sm:$0xff]
    %v163 = vld [vmem:[#allocation5 + $0x1a8] sm:$0xff]
    %v164 = vld [vmem:[#allocation5 + $0x1b0] sm:$0xff]
    %v165 = vld [vmem:[#allocation5 + $0x1b8] sm:$0xff]
    %v166 = vld [vmem:[#allocation5 + $0x1c0] sm:$0xff]
    %v167 = vld [vmem:[#allocation5 + $0x1c8] sm:$0xff]
    %v168 = vld [vmem:[#allocation5 + $0x1d0] sm:$0xff]
    %v169 = vld [vmem:[#allocation5 + $0x1d8] sm:$0xff]
    %v170 = vld [vmem:[#allocation5 + $0x1e0] sm:$0xff]
    %v171 = vld [vmem:[#allocation5 + $0x1e8] sm:$0xff]
    %v172 = vld [vmem:[#allocation5 + $0x1f0] sm:$0xff]
    %v173 = vld [vmem:[#allocation5 + $0x1f8] sm:$0xff]
    %v174 = vld [vmem:[#allocation5 + $0x200] sm:$0xff]
    %v175 = vld [vmem:[#allocation5 + $0x208] sm:$0xff]
    %v176 = vld [vmem:[#allocation5 + $0x210] sm:$0xff]
    %v177 = vld [vmem:[#allocation5 + $0x218] sm:$0xff]
    %v178 = vld [vmem:[#allocation5 + $0x220] sm:$0xff]
    %v179 = vld [vmem:[#allocation5 + $0x228] sm:$0xff]
    %v180 = vld [vmem:[#allocation5 + $0x230] sm:$0xff]
    %v181 = vld [vmem:[#allocation5 + $0x238] sm:$0xff]
    %v182 = vld [vmem:[#allocation5 + $0x240] sm:$0xff]
    %v183 = vld [vmem:[#allocation5 + $0x248] sm:$0xff]
    %v184 = vld [vmem:[#allocation5 + $0x250] sm:$0xff]
    %v185 = vld [vmem:[#allocation5 + $0x258] sm:$0xff]
    %v186 = vld [vmem:[#allocation5 + $0x260] sm:$0xff]
    %v187 = vld [vmem:[#allocation5 + $0x268] sm:$0xff]
    %v188 = vld [vmem:[#allocation5 + $0x270] sm:$0xff]
    %v189 = vld [vmem:[#allocation5 + $0x278] sm:$0xff]
    %v190 = vld [vmem:[#allocation5 + $0x280] sm:$0xff]
    %v191 = vld [vmem:[#allocation5 + $0x288] sm:$0xff]
    %v192 = vld [vmem:[#allocation5 + $0x290] sm:$0xff]
    %v193 = vld [vmem:[#allocation5 + $0x298] sm:$0xff]
    %v194 = vld [vmem:[#allocation5 + $0x2a0] sm:$0xff]
    %v195 = vld [vmem:[#allocation5 + $0x2a8] sm:$0xff]
    %v196 = vld [vmem:[#allocation5 + $0x2b0] sm:$0xff]
    %v197 = vld [vmem:[#allocation5 + $0x2b8] sm:$0xff]
    %v198 = vld [vmem:[#allocation5 + $0x2c0] sm:$0xff]
    %v199 = vld [vmem:[#allocation5 + $0x2c8] sm:$0xff]
    %v200 = vld [vmem:[#allocation5 + $0x2d0] sm:$0xff]
    %v201 = vld [vmem:[#allocation5 + $0x2d8] sm:$0xff]
    %v202 = vld [vmem:[#allocation5 + $0x2e0] sm:$0xff]
    %v203 = vld [vmem:[#allocation5 + $0x2e8] sm:$0xff]
    %v204 = vld [vmem:[#allocation5 + $0x2f0] sm:$0xff]
    %v205 = vld [vmem:[#allocation5 + $0x2f8] sm:$0xff]
    %v206 = vld [vmem:[#allocation5 + $0x300] sm:$0xff]
    %v207 = vld [vmem:[#allocation5 + $0x308] sm:$0xff]
    %v208 = vld [vmem:[#allocation5 + $0x310] sm:$0xff]
    %v209 = vld [vmem:[#allocation5 + $0x318] sm:$0xff]
    %v210 = vld [vmem:[#allocation5 + $0x320] sm:$0xff]
    %v211 = vld [vmem:[#allocation5 + $0x328] sm:$0xff]
    %v212 = vld [vmem:[#allocation5 + $0x330] sm:$0xff]
    %v213 = vld [vmem:[#allocation5 + $0x338] sm:$0xff]
    %v214 = vld [vmem:[#allocation5 + $0x340] sm:$0xff]
    %v215 = vld [vmem:[#allocation5 + $0x348] sm:$0xff]
    %v216 = vld [vmem:[#allocation5 + $0x350] sm:$0xff]
    %v217 = vld [vmem:[#allocation5 + $0x358] sm:$0xff]
    %v218 = vld [vmem:[#allocation5 + $0x360] sm:$0xff]
    %v219 = vld [vmem:[#allocation5 + $0x368] sm:$0xff]
    %v220 = vld [vmem:[#allocation5 + $0x370] sm:$0xff]
    %v221 = vld [vmem:[#allocation5 + $0x378] sm:$0xff]
    %v222 = vld [vmem:[#allocation5 + $0x380] sm:$0xff]
    %v223 = vld [vmem:[#allocation5 + $0x388] sm:$0xff]
    %v224 = vld [vmem:[#allocation5 + $0x390] sm:$0xff]
    %v225 = vld [vmem:[#allocation5 + $0x398] sm:$0xff]
    %v226 = vld [vmem:[#allocation5 + $0x3a0] sm:$0xff]
    %v227 = vld [vmem:[#allocation5 + $0x3a8] sm:$0xff]
    %v228 = vld [vmem:[#allocation5 + $0x3b0] sm:$0xff]
    %v229 = vld [vmem:[#allocation5 + $0x3b8] sm:$0xff]
    %v230 = vld [vmem:[#allocation5 + $0x3c0] sm:$0xff]
    %v231 = vld [vmem:[#allocation5 + $0x3c8] sm:$0xff]
    %v232 = vld [vmem:[#allocation5 + $0x3d0] sm:$0xff]
    %v233 = vld [vmem:[#allocation5 + $0x3d8] sm:$0xff]
    %v234 = vld [vmem:[#allocation5 + $0x3e0] sm:$0xff]
    %v235 = vld [vmem:[#allocation5 + $0x3e8] sm:$0xff]
    %v236 = vld [vmem:[#allocation5 + $0x3f0] sm:$0xff]
    %v237 = vld [vmem:[#allocation5 + $0x3f8] sm:$0xff]
    %v238 = vld [vmem:[#allocation5 + $0x400] sm:$0xff]
    %v239 = vld [vmem:[#allocation5 + $0x408] sm:$0xff]
    %v240 = vld [vmem:[#allocation5 + $0x410] sm:$0xff]
    %v241 = vld [vmem:[#allocation5 + $0x418] sm:$0xff]
    %v242 = vld [vmem:[#allocation5 + $0x420] sm:$0xff]
    %v243 = vld [vmem:[#allocation5 + $0x428] sm:$0xff]
    %v244 = vld [vmem:[#allocation5 + $0x430] sm:$0xff]
    %v245 = vld [vmem:[#allocation5 + $0x438] sm:$0xff]
    %v246 = vld [vmem:[#allocation5 + $0x440] sm:$0xff]
    %v247 = vld [vmem:[#allocation5 + $0x448] sm:$0xff]
    %v248 = vld [vmem:[#allocation5 + $0x450] sm:$0xff]
    %v249 = vld [vmem:[#allocation5 + $0x458] sm:$0xff]
    %v250 = vld [vmem:[#allocation5 + $0x460] sm:$0xff]
    %v251 = vld [vmem:[#allocation5 + $0x468] sm:$0xff]
    %v252 = vld [vmem:[#allocation5 + $0x470] sm:$0xff]
    %v253 = vld [vmem:[#allocation5 + $0x478] sm:$0xff]
    %v254 = vld [vmem:[#allocation5 + $0x480] sm:$0xff]
    %v255 = vld [vmem:[#allocation5 + $0x488] sm:$0xff]
    %v256 = vld [vmem:[#allocation5 + $0x490] sm:$0xff]
    %v257 = vld [vmem:[#allocation5 + $0x498] sm:$0xff]
    %v258 = vld [vmem:[#allocation5 + $0x4a0] sm:$0xff]
    %v259 = vld [vmem:[#allocation5 + $0x4a8] sm:$0xff]
    %v260 = vld [vmem:[#allocation5 + $0x4b0] sm:$0xff]
    %v261 = vld [vmem:[#allocation5 + $0x4b8] sm:$0xff]
    %v262 = vld [vmem:[#allocation5 + $0x4c0] sm:$0xff]
    %v263 = vld [vmem:[#allocation5 + $0x4c8] sm:$0xff]
    %v264 = vld [vmem:[#allocation5 + $0x4d0] sm:$0xff]
    %v265 = vld [vmem:[#allocation5 + $0x4d8] sm:$0xff]
    %v266 = vld [vmem:[#allocation5 + $0x4e0] sm:$0xff]
    %v267 = vld [vmem:[#allocation5 + $0x4e8] sm:$0xff]
    %v268 = vld [vmem:[#allocation5 + $0x4f0] sm:$0xff]
    %v269 = vld [vmem:[#allocation5 + $0x4f8] sm:$0xff]
    %v270 = vld [vmem:[#allocation5 + $0x500] sm:$0xff]
    %v271 = vld [vmem:[#allocation5 + $0x508] sm:$0xff]
    %v272 = vld [vmem:[#allocation5 + $0x510] sm:$0xff]
    %v273 = vld [vmem:[#allocation5 + $0x518] sm:$0xff]
    %v274 = vld [vmem:[#allocation5 + $0x520] sm:$0xff]
    %v275 = vld [vmem:[#allocation5 + $0x528] sm:$0xff]
    %v276 = vld [vmem:[#allocation5 + $0x530] sm:$0xff]
    %v277 = vld [vmem:[#allocation5 + $0x538] sm:$0xff]
    %v278 = vld [vmem:[#allocation5 + $0x540] sm:$0xff]
    %v279 = vld [vmem:[#allocation5 + $0x548] sm:$0xff]
    %v280 = vld [vmem:[#allocation5 + $0x550] sm:$0xff]
    %v281 = vld [vmem:[#allocation5 + $0x558] sm:$0xff]
    %v282 = vld [vmem:[#allocation5 + $0x560] sm:$0xff]
    %v283 = vld [vmem:[#allocation5 + $0x568] sm:$0xff]
    %v284 = vld [vmem:[#allocation5 + $0x570] sm:$0xff]
    %v285 = vld [vmem:[#allocation5 + $0x578] sm:$0xff]
    %v286 = vld [vmem:[#allocation5 + $0x580] sm:$0xff]
    %v287 = vld [vmem:[#allocation5 + $0x588] sm:$0xff]
    %v288 = vld [vmem:[#allocation5 + $0x590] sm:$0xff]
    %v289 = vld [vmem:[#allocation5 + $0x598] sm:$0xff]
    %v290 = vld [vmem:[#allocation5 + $0x5a0] sm:$0xff]
    %v291 = vld [vmem:[#allocation5 + $0x5a8] sm:$0xff]
    %v292 = vld [vmem:[#allocation5 + $0x5b0] sm:$0xff]
    %v293 = vld [vmem:[#allocation5 + $0x5b8] sm:$0xff]
    %v294 = vld [vmem:[#allocation5 + $0x5c0] sm:$0xff]
    %v295 = vld [vmem:[#allocation5 + $0x5c8] sm:$0xff]
    %v296 = vld [vmem:[#allocation5 + $0x5d0] sm:$0xff]
    %v297 = vld [vmem:[#allocation5 + $0x5d8] sm:$0xff]
    %v298 = vld [vmem:[#allocation5 + $0x5e0] sm:$0xff]
    %v299 = vld [vmem:[#allocation5 + $0x5e8] sm:$0xff]
    %v300 = vld [vmem:[#allocation5 + $0x5f0] sm:$0xff]
    %v301 = vld [vmem:[#allocation5 + $0x5f8] sm:$0xff]
    %v302 = vld [vmem:[#allocation5 + $0x600] sm:$0xff]
    %v303 = vld [vmem:[#allocation5 + $0x608] sm:$0xff]
    %v304 = vld [vmem:[#allocation5 + $0x610] sm:$0xff]
    %v305 = vld [vmem:[#allocation5 + $0x618] sm:$0xff]
    %v306 = vld [vmem:[%s2] sm:$0xf]
    %v308 = vlaneseq
    %v309 = vshrl.u32 %v308, 7
    %v310 = vsub.s32 0, %v309
    %v311 = vrot.slane %v306, %v310
    %v312 = vlaneseq
    %v313 = vshrl.u32 %v312, 7
    %v314 = vsub.s32 1, %v313
    %v315 = vrot.slane %v306, %v314
    %v316 = vlaneseq
    %v317 = vshrl.u32 %v316, 7
    %v318 = vsub.s32 2, %v317
    %v319 = vrot.slane %v306, %v318
    %v320 = vlaneseq
    %v321 = vshrl.u32 %v320, 7
    %v322 = vsub.s32 3, %v321
    %v323 = vrot.slane %v306, %v322
    %v524 = vunpack.c.l.b16 %v110
    %v525 = vunpack.c.h.b16 %v110
    %v526 = vunpack.c.l.b16 %v111
    %v527 = vunpack.c.h.b16 %v111
    %v528 = vunpack.c.l.b16 %v112
    %v529 = vunpack.c.h.b16 %v112
    %v530 = vunpack.c.l.b16 %v113
    %v531 = vunpack.c.h.b16 %v113
    %v532 = vunpack.c.l.b16 %v114
    %v533 = vunpack.c.h.b16 %v114
    %v534 = vunpack.c.l.b16 %v115
    %v535 = vunpack.c.h.b16 %v115
    %v536 = vunpack.c.l.b16 %v116
    %v537 = vunpack.c.h.b16 %v116
    %v538 = vunpack.c.l.b16 %v117
    %v539 = vunpack.c.h.b16 %v117
    %v540 = vunpack.c.l.b16 %v118
    %v541 = vunpack.c.h.b16 %v118
    %v542 = vunpack.c.l.b16 %v119
    %v543 = vunpack.c.h.b16 %v119
    %v544 = vunpack.c.l.b16 %v120
    %v545 = vunpack.c.h.b16 %v120
    %v546 = vunpack.c.l.b16 %v121
    %v547 = vunpack.c.h.b16 %v121
    %v548 = vunpack.c.l.b16 %v122
    %v549 = vunpack.c.h.b16 %v122
    %v550 = vunpack.c.l.b16 %v123
    %v551 = vunpack.c.h.b16 %v123
    %v552 = vunpack.c.l.b16 %v124
    %v553 = vunpack.c.h.b16 %v124
    %v554 = vunpack.c.l.b16 %v125
    %v555 = vunpack.c.h.b16 %v125
    %v556 = vunpack.c.l.b16 %v126
    %v557 = vunpack.c.h.b16 %v126
    %v558 = vunpack.c.l.b16 %v127
    %v559 = vunpack.c.h.b16 %v127
    %v560 = vunpack.c.l.b16 %v128
    %v561 = vunpack.c.h.b16 %v128
    %v562 = vunpack.c.l.b16 %v129
    %v563 = vunpack.c.h.b16 %v129
    %v564 = vunpack.c.l.b16 %v130
    %v565 = vunpack.c.h.b16 %v130
    %v566 = vunpack.c.l.b16 %v131
    %v567 = vunpack.c.h.b16 %v131
    %v568 = vunpack.c.l.b16 %v132
    %v569 = vunpack.c.h.b16 %v132
    %v570 = vunpack.c.l.b16 %v133
    %v571 = vunpack.c.h.b16 %v133
    %v572 = vunpack.c.l.b16 %v134
    %v573 = vunpack.c.h.b16 %v134
    %v574 = vunpack.c.l.b16 %v135
    %v575 = vunpack.c.h.b16 %v135
    %v576 = vunpack.c.l.b16 %v136
    %v577 = vunpack.c.h.b16 %v136
    %v578 = vunpack.c.l.b16 %v137
    %v579 = vunpack.c.h.b16 %v137
    %v580 = vunpack.c.l.b16 %v138
    %v581 = vunpack.c.h.b16 %v138
    %v582 = vunpack.c.l.b16 %v139
    %v583 = vunpack.c.h.b16 %v139
    %v584 = vunpack.c.l.b16 %v140
    %v585 = vunpack.c.h.b16 %v140
    %v586 = vunpack.c.l.b16 %v141
    %v587 = vunpack.c.h.b16 %v141
    %v588 = vunpack.c.l.b16 %v142
    %v589 = vunpack.c.h.b16 %v142
    %v590 = vunpack.c.l.b16 %v143
    %v591 = vunpack.c.h.b16 %v143
    %v592 = vunpack.c.l.b16 %v144
    %v593 = vunpack.c.h.b16 %v144
    %v594 = vunpack.c.l.b16 %v145
    %v595 = vunpack.c.h.b16 %v145
    %v596 = vunpack.c.l.b16 %v146
    %v597 = vunpack.c.h.b16 %v146
    %v598 = vunpack.c.l.b16 %v147
    %v599 = vunpack.c.h.b16 %v147
    %v600 = vunpack.c.l.b16 %v148
    %v601 = vunpack.c.h.b16 %v148
    %v602 = vunpack.c.l.b16 %v149
    %v603 = vunpack.c.h.b16 %v149
    %v604 = vunpack.c.l.b16 %v150
    %v605 = vunpack.c.h.b16 %v150
    %v606 = vunpack.c.l.b16 %v151
    %v607 = vunpack.c.h.b16 %v151
    %v608 = vunpack.c.l.b16 %v152
    %v609 = vunpack.c.h.b16 %v152
    %v610 = vunpack.c.l.b16 %v153
    %v611 = vunpack.c.h.b16 %v153
    %v612 = vunpack.c.l.b16 %v154
    %v613 = vunpack.c.h.b16 %v154
    %v614 = vunpack.c.l.b16 %v155
    %v615 = vunpack.c.h.b16 %v155
    %v616 = vunpack.c.l.b16 %v156
    %v617 = vunpack.c.h.b16 %v156
    %v618 = vunpack.c.l.b16 %v157
    %v619 = vunpack.c.h.b16 %v157
    %v620 = vunpack.c.l.b16 %v158
    %v621 = vunpack.c.h.b16 %v158
    %v622 = vunpack.c.l.b16 %v159
    %v623 = vunpack.c.h.b16 %v159
    %v624 = vunpack.c.l.b16 %v160
    %v625 = vunpack.c.h.b16 %v160
    %v626 = vunpack.c.l.b16 %v161
    %v627 = vunpack.c.h.b16 %v161
    %v628 = vunpack.c.l.b16 %v162
    %v629 = vunpack.c.h.b16 %v162
    %v630 = vunpack.c.l.b16 %v163
    %v631 = vunpack.c.h.b16 %v163
    %v632 = vunpack.c.l.b16 %v164
    %v633 = vunpack.c.h.b16 %v164
    %v634 = vunpack.c.l.b16 %v165
    %v635 = vunpack.c.h.b16 %v165
    %v636 = vunpack.c.l.b16 %v166
    %v637 = vunpack.c.h.b16 %v166
    %v638 = vunpack.c.l.b16 %v167
    %v639 = vunpack.c.h.b16 %v167
    %v640 = vunpack.c.l.b16 %v168
    %v641 = vunpack.c.h.b16 %v168
    %v642 = vunpack.c.l.b16 %v169
    %v643 = vunpack.c.h.b16 %v169
    %v644 = vunpack.c.l.b16 %v170
    %v645 = vunpack.c.h.b16 %v170
    %v646 = vunpack.c.l.b16 %v171
    %v647 = vunpack.c.h.b16 %v171
    %v648 = vunpack.c.l.b16 %v172
    %v649 = vunpack.c.h.b16 %v172
    %v650 = vunpack.c.l.b16 %v173
    %v651 = vunpack.c.h.b16 %v173
    %v652 = vunpack.c.l.b16 %v174
    %v653 = vunpack.c.h.b16 %v174
    %v654 = vunpack.c.l.b16 %v175
    %v655 = vunpack.c.h.b16 %v175
    %v656 = vunpack.c.l.b16 %v176
    %v657 = vunpack.c.h.b16 %v176
    %v658 = vunpack.c.l.b16 %v177
    %v659 = vunpack.c.h.b16 %v177
    %v660 = vunpack.c.l.b16 %v178
    %v661 = vunpack.c.h.b16 %v178
    %v662 = vunpack.c.l.b16 %v179
    %v663 = vunpack.c.h.b16 %v179
    %v664 = vunpack.c.l.b16 %v180
    %v665 = vunpack.c.h.b16 %v180
    %v666 = vunpack.c.l.b16 %v181
    %v667 = vunpack.c.h.b16 %v181
    %v668 = vunpack.c.l.b16 %v182
    %v669 = vunpack.c.h.b16 %v182
    %v670 = vunpack.c.l.b16 %v183
    %v671 = vunpack.c.h.b16 %v183
    %v672 = vunpack.c.l.b16 %v184
    %v673 = vunpack.c.h.b16 %v184
    %v674 = vunpack.c.l.b16 %v185
    %v675 = vunpack.c.h.b16 %v185
    %v676 = vunpack.c.l.b16 %v186
    %v677 = vunpack.c.h.b16 %v186
    %v678 = vunpack.c.l.b16 %v187
    %v679 = vunpack.c.h.b16 %v187
    %v680 = vunpack.c.l.b16 %v188
    %v681 = vunpack.c.h.b16 %v188
    %v682 = vunpack.c.l.b16 %v189
    %v683 = vunpack.c.h.b16 %v189
    %v684 = vunpack.c.l.b16 %v190
    %v685 = vunpack.c.h.b16 %v190
    %v686 = vunpack.c.l.b16 %v191
    %v687 = vunpack.c.h.b16 %v191
    %v688 = vunpack.c.l.b16 %v192
    %v689 = vunpack.c.h.b16 %v192
    %v690 = vunpack.c.l.b16 %v193
    %v691 = vunpack.c.h.b16 %v193
    %v692 = vunpack.c.l.b16 %v194
    %v693 = vunpack.c.h.b16 %v194
    %v694 = vunpack.c.l.b16 %v195
    %v695 = vunpack.c.h.b16 %v195
    %v696 = vunpack.c.l.b16 %v196
    %v697 = vunpack.c.h.b16 %v196
    %v698 = vunpack.c.l.b16 %v197
    %v699 = vunpack.c.h.b16 %v197
    %v700 = vunpack.c.l.b16 %v198
    %v701 = vunpack.c.h.b16 %v198
    %v702 = vunpack.c.l.b16 %v199
    %v703 = vunpack.c.h.b16 %v199
    %v704 = vunpack.c.l.b16 %v200
    %v705 = vunpack.c.h.b16 %v200
    %v706 = vunpack.c.l.b16 %v201
    %v707 = vunpack.c.h.b16 %v201
    %v708 = vunpack.c.l.b16 %v202
    %v709 = vunpack.c.h.b16 %v202
    %v710 = vunpack.c.l.b16 %v203
    %v711 = vunpack.c.h.b16 %v203
    %v712 = vunpack.c.l.b16 %v204
    %v713 = vunpack.c.h.b16 %v204
    %v714 = vunpack.c.l.b16 %v205
    %v715 = vunpack.c.h.b16 %v205
    %v716 = vunpack.c.l.b16 %v206
    %v717 = vunpack.c.h.b16 %v206
    %v718 = vunpack.c.l.b16 %v207
    %v719 = vunpack.c.h.b16 %v207
    %v720 = vunpack.c.l.b16 %v208
    %v721 = vunpack.c.h.b16 %v208
    %v722 = vunpack.c.l.b16 %v209
    %v723 = vunpack.c.h.b16 %v209
    %v724 = vunpack.c.l.b16 %v210
    %v725 = vunpack.c.h.b16 %v210
    %v726 = vunpack.c.l.b16 %v211
    %v727 = vunpack.c.h.b16 %v211
    %v728 = vunpack.c.l.b16 %v212
    %v729 = vunpack.c.h.b16 %v212
    %v730 = vunpack.c.l.b16 %v213
    %v731 = vunpack.c.h.b16 %v213
    %v732 = vunpack.c.l.b16 %v214
    %v733 = vunpack.c.h.b16 %v214
    %v734 = vunpack.c.l.b16 %v215
    %v735 = vunpack.c.h.b16 %v215
    %v736 = vunpack.c.l.b16 %v216
    %v737 = vunpack.c.h.b16 %v216
    %v738 = vunpack.c.l.b16 %v217
    %v739 = vunpack.c.h.b16 %v217
    %v740 = vunpack.c.l.b16 %v218
    %v741 = vunpack.c.h.b16 %v218
    %v742 = vunpack.c.l.b16 %v219
    %v743 = vunpack.c.h.b16 %v219
    %v744 = vunpack.c.l.b16 %v220
    %v745 = vunpack.c.h.b16 %v220
    %v746 = vunpack.c.l.b16 %v221
    %v747 = vunpack.c.h.b16 %v221
    %v748 = vunpack.c.l.b16 %v222
    %v749 = vunpack.c.h.b16 %v222
    %v750 = vunpack.c.l.b16 %v223
    %v751 = vunpack.c.h.b16 %v223
    %v752 = vunpack.c.l.b16 %v224
    %v753 = vunpack.c.h.b16 %v224
    %v754 = vunpack.c.l.b16 %v225
    %v755 = vunpack.c.h.b16 %v225
    %v756 = vunpack.c.l.b16 %v226
    %v757 = vunpack.c.h.b16 %v226
    %v758 = vunpack.c.l.b16 %v227
    %v759 = vunpack.c.h.b16 %v227
    %v760 = vunpack.c.l.b16 %v228
    %v761 = vunpack.c.h.b16 %v228
    %v762 = vunpack.c.l.b16 %v229
    %v763 = vunpack.c.h.b16 %v229
    %v764 = vunpack.c.l.b16 %v230
    %v765 = vunpack.c.h.b16 %v230
    %v766 = vunpack.c.l.b16 %v231
    %v767 = vunpack.c.h.b16 %v231
    %v768 = vunpack.c.l.b16 %v232
    %v769 = vunpack.c.h.b16 %v232
    %v770 = vunpack.c.l.b16 %v233
    %v771 = vunpack.c.h.b16 %v233
    %v772 = vunpack.c.l.b16 %v234
    %v773 = vunpack.c.h.b16 %v234
    %v774 = vunpack.c.l.b16 %v235
    %v775 = vunpack.c.h.b16 %v235
    %v776 = vunpack.c.l.b16 %v236
    %v777 = vunpack.c.h.b16 %v236
    %v778 = vunpack.c.l.b16 %v237
    %v779 = vunpack.c.h.b16 %v237
    %v780 = vunpack.c.l.b16 %v238
    %v781 = vunpack.c.h.b16 %v238
    %v782 = vunpack.c.l.b16 %v239
    %v783 = vunpack.c.h.b16 %v239
    %v784 = vunpack.c.l.b16 %v240
    %v785 = vunpack.c.h.b16 %v240
    %v786 = vunpack.c.l.b16 %v241
    %v787 = vunpack.c.h.b16 %v241
    %v788 = vunpack.c.l.b16 %v242
    %v789 = vunpack.c.h.b16 %v242
    %v790 = vunpack.c.l.b16 %v243
    %v791 = vunpack.c.h.b16 %v243
    %v792 = vunpack.c.l.b16 %v244
    %v793 = vunpack.c.h.b16 %v244
    %v794 = vunpack.c.l.b16 %v245
    %v795 = vunpack.c.h.b16 %v245
    %v796 = vunpack.c.l.b16 %v246
    %v797 = vunpack.c.h.b16 %v246
    %v798 = vunpack.c.l.b16 %v247
    %v799 = vunpack.c.h.b16 %v247
    %v800 = vunpack.c.l.b16 %v248
    %v801 = vunpack.c.h.b16 %v248
    %v802 = vunpack.c.l.b16 %v249
    %v803 = vunpack.c.h.b16 %v249
    %v804 = vunpack.c.l.b16 %v250
    %v805 = vunpack.c.h.b16 %v250
    %v806 = vunpack.c.l.b16 %v251
    %v807 = vunpack.c.h.b16 %v251
    %v808 = vunpack.c.l.b16 %v252
    %v809 = vunpack.c.h.b16 %v252
    %v810 = vunpack.c.l.b16 %v253
    %v811 = vunpack.c.h.b16 %v253
    %v812 = vunpack.c.l.b16 %v254
    %v813 = vunpack.c.h.b16 %v254
    %v814 = vunpack.c.l.b16 %v255
    %v815 = vunpack.c.h.b16 %v255
    %v816 = vunpack.c.l.b16 %v256
    %v817 = vunpack.c.h.b16 %v256
    %v818 = vunpack.c.l.b16 %v257
    %v819 = vunpack.c.h.b16 %v257
    %v820 = vunpack.c.l.b16 %v258
    %v821 = vunpack.c.h.b16 %v258
    %v822 = vunpack.c.l.b16 %v259
    %v823 = vunpack.c.h.b16 %v259
    %v824 = vunpack.c.l.b16 %v260
    %v825 = vunpack.c.h.b16 %v260
    %v826 = vunpack.c.l.b16 %v261
    %v827 = vunpack.c.h.b16 %v261
    %v828 = vunpack.c.l.b16 %v262
    %v829 = vunpack.c.h.b16 %v262
    %v830 = vunpack.c.l.b16 %v263
    %v831 = vunpack.c.h.b16 %v263
    %v832 = vunpack.c.l.b16 %v264
    %v833 = vunpack.c.h.b16 %v264
    %v834 = vunpack.c.l.b16 %v265
    %v835 = vunpack.c.h.b16 %v265
    %v836 = vunpack.c.l.b16 %v266
    %v837 = vunpack.c.h.b16 %v266
    %v838 = vunpack.c.l.b16 %v267
    %v839 = vunpack.c.h.b16 %v267
    %v840 = vunpack.c.l.b16 %v268
    %v841 = vunpack.c.h.b16 %v268
    %v842 = vunpack.c.l.b16 %v269
    %v843 = vunpack.c.h.b16 %v269
    %v844 = vunpack.c.l.b16 %v270
    %v845 = vunpack.c.h.b16 %v270
    %v846 = vunpack.c.l.b16 %v271
    %v847 = vunpack.c.h.b16 %v271
    %v848 = vunpack.c.l.b16 %v272
    %v849 = vunpack.c.h.b16 %v272
    %v850 = vunpack.c.l.b16 %v273
    %v851 = vunpack.c.h.b16 %v273
    %v852 = vunpack.c.l.b16 %v274
    %v853 = vunpack.c.h.b16 %v274
    %v854 = vunpack.c.l.b16 %v275
    %v855 = vunpack.c.h.b16 %v275
    %v856 = vunpack.c.l.b16 %v276
    %v857 = vunpack.c.h.b16 %v276
    %v858 = vunpack.c.l.b16 %v277
    %v859 = vunpack.c.h.b16 %v277
    %v860 = vunpack.c.l.b16 %v278
    %v861 = vunpack.c.h.b16 %v278
    %v862 = vunpack.c.l.b16 %v279
    %v863 = vunpack.c.h.b16 %v279
    %v864 = vunpack.c.l.b16 %v280
    %v865 = vunpack.c.h.b16 %v280
    %v866 = vunpack.c.l.b16 %v281
    %v867 = vunpack.c.h.b16 %v281
    %v868 = vunpack.c.l.b16 %v282
    %v869 = vunpack.c.h.b16 %v282
    %v870 = vunpack.c.l.b16 %v283
    %v871 = vunpack.c.h.b16 %v283
    %v872 = vunpack.c.l.b16 %v284
    %v873 = vunpack.c.h.b16 %v284
    %v874 = vunpack.c.l.b16 %v285
    %v875 = vunpack.c.h.b16 %v285
    %v876 = vunpack.c.l.b16 %v286
    %v877 = vunpack.c.h.b16 %v286
    %v878 = vunpack.c.l.b16 %v287
    %v879 = vunpack.c.h.b16 %v287
    %v880 = vunpack.c.l.b16 %v288
    %v881 = vunpack.c.h.b16 %v288
    %v882 = vunpack.c.l.b16 %v289
    %v883 = vunpack.c.h.b16 %v289
    %v884 = vunpack.c.l.b16 %v290
    %v885 = vunpack.c.h.b16 %v290
    %v886 = vunpack.c.l.b16 %v291
    %v887 = vunpack.c.h.b16 %v291
    %v888 = vunpack.c.l.b16 %v292
    %v889 = vunpack.c.h.b16 %v292
    %v890 = vunpack.c.l.b16 %v293
    %v891 = vunpack.c.h.b16 %v293
    %v892 = vunpack.c.l.b16 %v294
    %v893 = vunpack.c.h.b16 %v294
    %v894 = vunpack.c.l.b16 %v295
    %v895 = vunpack.c.h.b16 %v295
    %v896 = vunpack.c.l.b16 %v296
    %v897 = vunpack.c.h.b16 %v296
    %v898 = vunpack.c.l.b16 %v297
    %v899 = vunpack.c.h.b16 %v297
    %v900 = vunpack.c.l.b16 %v298
    %v901 = vunpack.c.h.b16 %v298
    %v902 = vunpack.c.l.b16 %v299
    %v903 = vunpack.c.h.b16 %v299
    %v904 = vunpack.c.l.b16 %v300
    %v905 = vunpack.c.h.b16 %v300
    %v906 = vunpack.c.l.b16 %v301
    %v907 = vunpack.c.h.b16 %v301
    %v908 = vunpack.c.l.b16 %v302
    %v909 = vunpack.c.h.b16 %v302
    %v910 = vunpack.c.l.b16 %v303
    %v911 = vunpack.c.h.b16 %v303
    %v912 = vunpack.c.l.b16 %v304
    %v913 = vunpack.c.h.b16 %v304
    %v914 = vunpack.c.l.b16 %v305
    %v915 = vunpack.c.h.b16 %v305
    %v916 = vpack.c.b16 %v528, %v524
    %v917 = vpack.c.b16 %v529, %v525
    %v918 = vpack.c.b16 %v530, %v526
    %v919 = vpack.c.b16 %v531, %v527
    %v920 = vpack.c.b16 %v536, %v532
    %v921 = vpack.c.b16 %v537, %v533
    %v922 = vpack.c.b16 %v538, %v534
    %v923 = vpack.c.b16 %v539, %v535
    %v924 = vpack.c.b16 %v544, %v540
    %v925 = vpack.c.b16 %v545, %v541
    %v926 = vpack.c.b16 %v546, %v542
    %v927 = vpack.c.b16 %v547, %v543
    %v928 = vpack.c.b16 %v552, %v548
    %v929 = vpack.c.b16 %v553, %v549
    %v930 = vpack.c.b16 %v554, %v550
    %v931 = vpack.c.b16 %v555, %v551
    %v932 = vpack.c.b16 %v560, %v556
    %v933 = vpack.c.b16 %v561, %v557
    %v934 = vpack.c.b16 %v562, %v558
    %v935 = vpack.c.b16 %v563, %v559
    %v936 = vpack.c.b16 %v568, %v564
    %v937 = vpack.c.b16 %v569, %v565
    %v938 = vpack.c.b16 %v570, %v566
    %v939 = vpack.c.b16 %v571, %v567
    %v940 = vpack.c.b16 %v576, %v572
    %v941 = vpack.c.b16 %v577, %v573
    %v942 = vpack.c.b16 %v578, %v574
    %v943 = vpack.c.b16 %v579, %v575
    %v944 = vpack.c.b16 %v584, %v580
    %v945 = vpack.c.b16 %v585, %v581
    %v946 = vpack.c.b16 %v586, %v582
    %v947 = vpack.c.b16 %v587, %v583
    %v948 = vpack.c.b16 %v592, %v588
    %v949 = vpack.c.b16 %v593, %v589
    %v950 = vpack.c.b16 %v594, %v590
    %v951 = vpack.c.b16 %v595, %v591
    %v952 = vpack.c.b16 %v600, %v596
    %v953 = vpack.c.b16 %v601, %v597
    %v954 = vpack.c.b16 %v602, %v598
    %v955 = vpack.c.b16 %v603, %v599
    %v956 = vpack.c.b16 %v608, %v604
    %v957 = vpack.c.b16 %v609, %v605
    %v958 = vpack.c.b16 %v610, %v606
    %v959 = vpack.c.b16 %v611, %v607
    %v960 = vpack.c.b16 %v616, %v612
    %v961 = vpack.c.b16 %v617, %v613
    %v962 = vpack.c.b16 %v618, %v614
    %v963 = vpack.c.b16 %v619, %v615
    %v964 = vpack.c.b16 %v624, %v620
    %v965 = vpack.c.b16 %v625, %v621
    %v966 = vpack.c.b16 %v626, %v622
    %v967 = vpack.c.b16 %v627, %v623
    %v968 = vpack.c.b16 %v632, %v628
    %v969 = vpack.c.b16 %v633, %v629
    %v970 = vpack.c.b16 %v634, %v630
    %v971 = vpack.c.b16 %v635, %v631
    %v972 = vpack.c.b16 %v640, %v636
    %v973 = vpack.c.b16 %v641, %v637
    %v974 = vpack.c.b16 %v642, %v638
    %v975 = vpack.c.b16 %v643, %v639
    %v976 = vpack.c.b16 %v648, %v644
    %v977 = vpack.c.b16 %v649, %v645
    %v978 = vpack.c.b16 %v650, %v646
    %v979 = vpack.c.b16 %v651, %v647
    %v980 = vpack.c.b16 %v656, %v652
    %v981 = vpack.c.b16 %v657, %v653
    %v982 = vpack.c.b16 %v658, %v654
    %v983 = vpack.c.b16 %v659, %v655
    %v984 = vpack.c.b16 %v664, %v660
    %v985 = vpack.c.b16 %v665, %v661
    %v986 = vpack.c.b16 %v666, %v662
    %v987 = vpack.c.b16 %v667, %v663
    %v988 = vpack.c.b16 %v672, %v668
    %v989 = vpack.c.b16 %v673, %v669
    %v990 = vpack.c.b16 %v674, %v670
    %v991 = vpack.c.b16 %v675, %v671
    %v992 = vpack.c.b16 %v680, %v676
    %v993 = vpack.c.b16 %v681, %v677
    %v994 = vpack.c.b16 %v682, %v678
    %v995 = vpack.c.b16 %v683, %v679
    %v996 = vpack.c.b16 %v688, %v684
    %v997 = vpack.c.b16 %v689, %v685
    %v998 = vpack.c.b16 %v690, %v686
    %v999 = vpack.c.b16 %v691, %v687
    %v1000 = vpack.c.b16 %v696, %v692
    %v1001 = vpack.c.b16 %v697, %v693
    %v1002 = vpack.c.b16 %v698, %v694
    %v1003 = vpack.c.b16 %v699, %v695
    %v1004 = vpack.c.b16 %v704, %v700
    %v1005 = vpack.c.b16 %v705, %v701
    %v1006 = vpack.c.b16 %v706, %v702
    %v1007 = vpack.c.b16 %v707, %v703
    %v1008 = vpack.c.b16 %v712, %v708
    %v1009 = vpack.c.b16 %v713, %v709
    %v1010 = vpack.c.b16 %v714, %v710
    %v1011 = vpack.c.b16 %v715, %v711
    %v1012 = vpack.c.b16 %v720, %v716
    %v1013 = vpack.c.b16 %v721, %v717
    %v1014 = vpack.c.b16 %v722, %v718
    %v1015 = vpack.c.b16 %v723, %v719
    %v1016 = vpack.c.b16 %v728, %v724
    %v1017 = vpack.c.b16 %v729, %v725
    %v1018 = vpack.c.b16 %v730, %v726
    %v1019 = vpack.c.b16 %v731, %v727
    %v1020 = vpack.c.b16 %v736, %v732
    %v1021 = vpack.c.b16 %v737, %v733
    %v1022 = vpack.c.b16 %v738, %v734
    %v1023 = vpack.c.b16 %v739, %v735
    %v1024 = vpack.c.b16 %v744, %v740
    %v1025 = vpack.c.b16 %v745, %v741
    %v1026 = vpack.c.b16 %v746, %v742
    %v1027 = vpack.c.b16 %v747, %v743
    %v1028 = vpack.c.b16 %v752, %v748
    %v1029 = vpack.c.b16 %v753, %v749
    %v1030 = vpack.c.b16 %v754, %v750
    %v1031 = vpack.c.b16 %v755, %v751
    %v1032 = vpack.c.b16 %v760, %v756
    %v1033 = vpack.c.b16 %v761, %v757
    %v1034 = vpack.c.b16 %v762, %v758
    %v1035 = vpack.c.b16 %v763, %v759
    %v1036 = vpack.c.b16 %v768, %v764
    %v1037 = vpack.c.b16 %v769, %v765
    %v1038 = vpack.c.b16 %v770, %v766
    %v1039 = vpack.c.b16 %v771, %v767
    %v1040 = vpack.c.b16 %v776, %v772
    %v1041 = vpack.c.b16 %v777, %v773
    %v1042 = vpack.c.b16 %v778, %v774
    %v1043 = vpack.c.b16 %v779, %v775
    %v1044 = vpack.c.b16 %v784, %v780
    %v1045 = vpack.c.b16 %v785, %v781
    %v1046 = vpack.c.b16 %v786, %v782
    %v1047 = vpack.c.b16 %v787, %v783
    %v1048 = vpack.c.b16 %v792, %v788
    %v1049 = vpack.c.b16 %v793, %v789
    %v1050 = vpack.c.b16 %v794, %v790
    %v1051 = vpack.c.b16 %v795, %v791
    %v1052 = vpack.c.b16 %v800, %v796
    %v1053 = vpack.c.b16 %v801, %v797
    %v1054 = vpack.c.b16 %v802, %v798
    %v1055 = vpack.c.b16 %v803, %v799
    %v1056 = vpack.c.b16 %v808, %v804
    %v1057 = vpack.c.b16 %v809, %v805
    %v1058 = vpack.c.b16 %v810, %v806
    %v1059 = vpack.c.b16 %v811, %v807
    %v1060 = vpack.c.b16 %v816, %v812
    %v1061 = vpack.c.b16 %v817, %v813
    %v1062 = vpack.c.b16 %v818, %v814
    %v1063 = vpack.c.b16 %v819, %v815
    %v1064 = vpack.c.b16 %v824, %v820
    %v1065 = vpack.c.b16 %v825, %v821
    %v1066 = vpack.c.b16 %v826, %v822
    %v1067 = vpack.c.b16 %v827, %v823
    %v1068 = vpack.c.b16 %v832, %v828
    %v1069 = vpack.c.b16 %v833, %v829
    %v1070 = vpack.c.b16 %v834, %v830
    %v1071 = vpack.c.b16 %v835, %v831
    %v1072 = vpack.c.b16 %v840, %v836
    %v1073 = vpack.c.b16 %v841, %v837
    %v1074 = vpack.c.b16 %v842, %v838
    %v1075 = vpack.c.b16 %v843, %v839
    %v1076 = vpack.c.b16 %v848, %v844
    %v1077 = vpack.c.b16 %v849, %v845
    %v1078 = vpack.c.b16 %v850, %v846
    %v1079 = vpack.c.b16 %v851, %v847
    %v1080 = vpack.c.b16 %v856, %v852
    %v1081 = vpack.c.b16 %v857, %v853
    %v1082 = vpack.c.b16 %v858, %v854
    %v1083 = vpack.c.b16 %v859, %v855
    %v1084 = vpack.c.b16 %v864, %v860
    %v1085 = vpack.c.b16 %v865, %v861
    %v1086 = vpack.c.b16 %v866, %v862
    %v1087 = vpack.c.b16 %v867, %v863
    %v1088 = vpack.c.b16 %v872, %v868
    %v1089 = vpack.c.b16 %v873, %v869
    %v1090 = vpack.c.b16 %v874, %v870
    %v1091 = vpack.c.b16 %v875, %v871
    %v1092 = vpack.c.b16 %v880, %v876
    %v1093 = vpack.c.b16 %v881, %v877
    %v1094 = vpack.c.b16 %v882, %v878
    %v1095 = vpack.c.b16 %v883, %v879
    %v1096 = vpack.c.b16 %v888, %v884
    %v1097 = vpack.c.b16 %v889, %v885
    %v1098 = vpack.c.b16 %v890, %v886
    %v1099 = vpack.c.b16 %v891, %v887
    %v1100 = vpack.c.b16 %v896, %v892
    %v1101 = vpack.c.b16 %v897, %v893
    %v1102 = vpack.c.b16 %v898, %v894
    %v1103 = vpack.c.b16 %v899, %v895
    %v1104 = vpack.c.b16 %v904, %v900
    %v1105 = vpack.c.b16 %v905, %v901
    %v1106 = vpack.c.b16 %v906, %v902
    %v1107 = vpack.c.b16 %v907, %v903
    %v1108 = vpack.c.b16 %v912, %v908
    %v1109 = vpack.c.b16 %v913, %v909
    %v1110 = vpack.c.b16 %v914, %v910
    %v1111 = vpack.c.b16 %v915, %v911
    %vm1308 = vcmask 130048
    %v1310 = vsel %vm1308, %v109, 0
    %1312 = vmatprep.subr.bf16.mxu0 %v917
    %1313 = vmatpush1.bf16.msra.mxu0 %v916
    %1314 = vmatprep.subr.bf16.mxu0 %v921
    %1315 = vmatpush1.bf16.msra.mxu0 %v920
    %1316 = vmatprep.subr.bf16.mxu0 %v925
    %1317 = vmatpush1.bf16.msra.mxu0 %v924
    %1318 = vmatprep.subr.bf16.mxu0 %v929
    %1319 = vmatpush1.bf16.msra.mxu0 %v928
    %1320 = vmatprep.subr.bf16.mxu0 %v933
    %1321 = vmatpush1.bf16.msra.mxu0 %v932
    %1322 = vmatprep.subr.bf16.mxu0 %v937
    %1323 = vmatpush1.bf16.msra.mxu0 %v936
    %1324 = vmatprep.subr.bf16.mxu0 %v941
    %1325 = vmatpush1.bf16.msra.mxu0 %v940
    %1326 = vmatprep.subr.bf16.mxu0 %v945
    %1327 = vmatpush1.bf16.msra.mxu0 %v944
    %1328 = vmatprep.subr.bf16.mxu0 %v949
    %1329 = vmatpush1.bf16.msra.mxu0 %v948
    %1330 = vmatprep.subr.bf16.mxu0 %v953
    %1331 = vmatpush1.bf16.msra.mxu0 %v952
    %1332 = vmatprep.subr.bf16.mxu0 %v957
    %1333 = vmatpush1.bf16.msra.mxu0 %v956
    %1334 = vmatprep.subr.bf16.mxu0 %v961
    %1335 = vmatpush1.bf16.msra.mxu0 %v960
    %1336 = vmatprep.subr.bf16.mxu0 %v965
    %1337 = vmatpush1.bf16.msra.mxu0 %v964
    %1338 = vmatprep.subr.bf16.mxu0 %v969
    %1339 = vmatpush1.bf16.msra.mxu0 %v968
    %1340 = vmatprep.subr.bf16.mxu0 %v973
    %1341 = vmatpush1.bf16.msra.mxu0 %v972
    %1342 = vmatprep.subr.bf16.mxu0 %v977
    %1343 = vmatpush1.bf16.msra.mxu0 %v976
    %1344 = vmatprep.mubr.bf16.mxu0 %v104
    %1345 = vmatmul.mubr.bf16.gmra.mrb[0].mxu0 %v103
    %v1346 = vpop.f32.mrb[0].mxu0
    %v1347 = vadd.f32 %v311, %v1346
    %v1348 = vpop.f32.mrb[0].mxu0
    %v1349 = vadd.f32 %v315, %v1348
    %v1350 = vpop.f32.mrb[0].mxu0
    %v1351 = vadd.f32 %v311, %v1350
    %v1352 = vpop.f32.mrb[0].mxu0
    %v1353 = vadd.f32 %v315, %v1352
    %1354 = vdwg.mxu0
    %1355 = vmatprep.subr.bf16.mxu0 %v981
    %1356 = vmatpush1.bf16.msra.mxu0 %v980
    %1357 = vmatprep.subr.bf16.mxu0 %v985
    %1358 = vmatpush1.bf16.msra.mxu0 %v984
    %1359 = vmatprep.subr.bf16.mxu0 %v989
    %1360 = vmatpush1.bf16.msra.mxu0 %v988
    %1361 = vmatprep.subr.bf16.mxu0 %v993
    %1362 = vmatpush1.bf16.msra.mxu0 %v992
    %1363 = vmatprep.subr.bf16.mxu0 %v997
    %1364 = vmatpush1.bf16.msra.mxu0 %v996
    %1365 = vmatprep.subr.bf16.mxu0 %v1001
    %1366 = vmatpush1.bf16.msra.mxu0 %v1000
    %1367 = vmatprep.subr.bf16.mxu0 %v1005
    %1368 = vmatpush1.bf16.msra.mxu0 %v1004
    %1369 = vmatprep.subr.bf16.mxu0 %v1009
    %1370 = vmatpush1.bf16.msra.mxu0 %v1008
    %1371 = vmatprep.subr.bf16.mxu0 %v1013
    %1372 = vmatpush1.bf16.msra.mxu0 %v1012
    %1373 = vmatprep.subr.bf16.mxu0 %v1017
    %1374 = vmatpush1.bf16.msra.mxu0 %v1016
    %1375 = vmatprep.subr.bf16.mxu0 %v1021
    %1376 = vmatpush1.bf16.msra.mxu0 %v1020
    %1377 = vmatprep.subr.bf16.mxu0 %v1025
    %1378 = vmatpush1.bf16.msra.mxu0 %v1024
    %1379 = vmatprep.subr.bf16.mxu0 %v1029
    %1380 = vmatpush1.bf16.msra.mxu0 %v1028
    %1381 = vmatprep.subr.bf16.mxu0 %v1033
    %1382 = vmatpush1.bf16.msra.mxu0 %v1032
    %1383 = vmatprep.subr.bf16.mxu0 %v1037
    %1384 = vmatpush1.bf16.msra.mxu0 %v1036
    %1385 = vmatprep.subr.bf16.mxu0 %v1041
    %1386 = vmatpush1.bf16.msra.mxu0 %v1040
    %1387 = vmatprep.mubr.bf16.mxu0 %v106
    %1388 = vmatmul.mubr.bf16.gmra.mrb[0].mxu0 %v105
    %v1389 = vpop.f32.mrb[0].mxu0
    %v1390 = vadd.f32 %v1347, %v1389
    %v1391 = vpop.f32.mrb[0].mxu0
    %v1392 = vadd.f32 %v1349, %v1391
    %v1393 = vpop.f32.mrb[0].mxu0
    %v1394 = vadd.f32 %v1351, %v1393
    %v1395 = vpop.f32.mrb[0].mxu0
    %v1396 = vadd.f32 %v1353, %v1395
    %1397 = vdwg.mxu0
    %1398 = vmatprep.subr.bf16.mxu0 %v1045
    %1399 = vmatpush1.bf16.msra.mxu0 %v1044
    %1400 = vmatprep.subr.bf16.mxu0 %v1049
    %1401 = vmatpush1.bf16.msra.mxu0 %v1048
    %1402 = vmatprep.subr.bf16.mxu0 %v1053
    %1403 = vmatpush1.bf16.msra.mxu0 %v1052
    %1404 = vmatprep.subr.bf16.mxu0 %v1057
    %1405 = vmatpush1.bf16.msra.mxu0 %v1056
    %1406 = vmatprep.subr.bf16.mxu0 %v1061
    %1407 = vmatpush1.bf16.msra.mxu0 %v1060
    %1408 = vmatprep.subr.bf16.mxu0 %v1065
    %1409 = vmatpush1.bf16.msra.mxu0 %v1064
    %1410 = vmatprep.subr.bf16.mxu0 %v1069
    %1411 = vmatpush1.bf16.msra.mxu0 %v1068
    %1412 = vmatprep.subr.bf16.mxu0 %v1073
    %1413 = vmatpush1.bf16.msra.mxu0 %v1072
    %1414 = vmatprep.subr.bf16.mxu0 %v1077
    %1415 = vmatpush1.bf16.msra.mxu0 %v1076
    %1416 = vmatprep.subr.bf16.mxu0 %v1081
    %1417 = vmatpush1.bf16.msra.mxu0 %v1080
    %1418 = vmatprep.subr.bf16.mxu0 %v1085
    %1419 = vmatpush1.bf16.msra.mxu0 %v1084
    %1420 = vmatprep.subr.bf16.mxu0 %v1089
    %1421 = vmatpush1.bf16.msra.mxu0 %v1088
    %1422 = vmatprep.subr.bf16.mxu0 %v1093
    %1423 = vmatpush1.bf16.msra.mxu0 %v1092
    %1424 = vmatprep.subr.bf16.mxu0 %v1097
    %1425 = vmatpush1.bf16.msra.mxu0 %v1096
    %1426 = vmatprep.subr.bf16.mxu0 %v1101
    %1427 = vmatpush1.bf16.msra.mxu0 %v1100
    %1428 = vmatprep.subr.bf16.mxu0 %v1105
    %1429 = vmatpush1.bf16.msra.mxu0 %v1104
    %1430 = vmatprep.mubr.bf16.mxu0 %v108
    %1431 = vmatmul.mubr.bf16.gmra.mrb[0].mxu0 %v107
    %v1432 = vpop.f32.mrb[0].mxu0
    %v1433 = vadd.f32 %v1390, %v1432
    %v1434 = vpop.f32.mrb[0].mxu0
    %v1435 = vadd.f32 %v1392, %v1434
    %v1436 = vpop.f32.mrb[0].mxu0
    %v1437 = vadd.f32 %v1394, %v1436
    %v1438 = vpop.f32.mrb[0].mxu0
    %v1439 = vadd.f32 %v1396, %v1438
    %1440 = vdwg.mxu0
    %1441 = vmatprep.subr.bf16.mxu0 %v1109
    %1442 = vmatpush1.bf16.msra.mxu0 %v1108
    %1443 = vmatprep.subr.bf16.mxu0 0
    %1444 = vmatpush1.bf16.msra.mxu0 0
    %1445 = vmatprep.subr.bf16.mxu0 0
    %1446 = vmatpush1.bf16.msra.mxu0 0
    %1447 = vmatprep.subr.bf16.mxu0 0
    %1448 = vmatpush1.bf16.msra.mxu0 0
    %1449 = vmatprep.subr.bf16.mxu0 0
    %1450 = vmatpush1.bf16.msra.mxu0 0
    %1451 = vmatprep.subr.bf16.mxu0 0
    %1452 = vmatpush1.bf16.msra.mxu0 0
    %1453 = vmatprep.subr.bf16.mxu0 0
    %1454 = vmatpush1.bf16.msra.mxu0 0
    %1455 = vmatprep.subr.bf16.mxu0 0
    %1456 = vmatpush1.bf16.msra.mxu0 0
    %1457 = vmatprep.subr.bf16.mxu0 0
    %1458 = vmatpush1.bf16.msra.mxu0 0
    %1459 = vmatprep.subr.bf16.mxu0 0
    %1460 = vmatpush1.bf16.msra.mxu0 0
    %1461 = vmatprep.subr.bf16.mxu0 0
    %1462 = vmatpush1.bf16.msra.mxu0 0
    %1463 = vmatprep.subr.bf16.mxu0 0
    %1464 = vmatpush1.bf16.msra.mxu0 0
    %1465 = vmatprep.subr.bf16.mxu0 0
    %1466 = vmatpush1.bf16.msra.mxu0 0
    %1467 = vmatprep.subr.bf16.mxu0 0
    %1468 = vmatpush1.bf16.msra.mxu0 0
    %1469 = vmatprep.subr.bf16.mxu0 0
    %1470 = vmatpush1.bf16.msra.mxu0 0
    %1471 = vmatprep.subr.bf16.mxu0 0
    %1472 = vmatpush1.bf16.msra.mxu0 0
    %1473 = vmatprep.mubr.bf16.mxu0 0
    %1474 = vmatmul.mubr.bf16.gmra.mrb[0].mxu0 %v1310
    %v1475 = vpop.f32.mrb[0].mxu0
    %v1476 = vadd.f32 %v1433, %v1475
    %v1477 = vpop.f32.mrb[0].mxu0
    %v1478 = vadd.f32 %v1435, %v1477
    %v1479 = vpop.f32.mrb[0].mxu0
    %v1480 = vadd.f32 %v1437, %v1479
    %v1481 = vpop.f32.mrb[0].mxu0
    %v1482 = vadd.f32 %v1439, %v1481
    %1483 = vdwg.mxu0
    %1484 = vmatprep.subr.bf16.mxu0 %v919
    %1485 = vmatpush1.bf16.msra.mxu0 %v918
    %1486 = vmatprep.subr.bf16.mxu0 %v923
    %1487 = vmatpush1.bf16.msra.mxu0 %v922
    %1488 = vmatprep.subr.bf16.mxu0 %v927
    %1489 = vmatpush1.bf16.msra.mxu0 %v926
    %1490 = vmatprep.subr.bf16.mxu0 %v931
    %1491 = vmatpush1.bf16.msra.mxu0 %v930
    %1492 = vmatprep.subr.bf16.mxu0 %v935
    %1493 = vmatpush1.bf16.msra.mxu0 %v934
    %1494 = vmatprep.subr.bf16.mxu0 %v939
    %1495 = vmatpush1.bf16.msra.mxu0 %v938
    %1496 = vmatprep.subr.bf16.mxu0 %v943
    %1497 = vmatpush1.bf16.msra.mxu0 %v942
    %1498 = vmatprep.subr.bf16.mxu0 %v947
    %1499 = vmatpush1.bf16.msra.mxu0 %v946
    %1500 = vmatprep.subr.bf16.mxu0 %v951
    %1501 = vmatpush1.bf16.msra.mxu0 %v950
    %1502 = vmatprep.subr.bf16.mxu0 %v955
    %1503 = vmatpush1.bf16.msra.mxu0 %v954
    %1504 = vmatprep.subr.bf16.mxu0 %v959
    %1505 = vmatpush1.bf16.msra.mxu0 %v958
    %1506 = vmatprep.subr.bf16.mxu0 %v963
    %1507 = vmatpush1.bf16.msra.mxu0 %v962
    %1508 = vmatprep.subr.bf16.mxu0 %v967
    %1509 = vmatpush1.bf16.msra.mxu0 %v966
    %1510 = vmatprep.subr.bf16.mxu0 %v971
    %1511 = vmatpush1.bf16.msra.mxu0 %v970
    %1512 = vmatprep.subr.bf16.mxu0 %v975
    %1513 = vmatpush1.bf16.msra.mxu0 %v974
    %1514 = vmatprep.subr.bf16.mxu0 %v979
    %1515 = vmatpush1.bf16.msra.mxu0 %v978
    %1516 = vmatprep.mubr.bf16.mxu0 %v104
    %1517 = vmatmul.mubr.bf16.gmra.mrb[0].mxu0 %v103
    %v1518 = vpop.f32.mrb[0].mxu0
    %v1519 = vadd.f32 %v319, %v1518
    %v1520 = vpop.f32.mrb[0].mxu0
    %v1521 = vadd.f32 %v323, %v1520
    %v1522 = vpop.f32.mrb[0].mxu0
    %v1523 = vadd.f32 %v319, %v1522
    %v1524 = vpop.f32.mrb[0].mxu0
    %v1525 = vadd.f32 %v323, %v1524
    %1526 = vdwg.mxu0
    %1527 = vmatprep.subr.bf16.mxu0 %v983
    %1528 = vmatpush1.bf16.msra.mxu0 %v982
    %1529 = vmatprep.subr.bf16.mxu0 %v987
    %1530 = vmatpush1.bf16.msra.mxu0 %v986
    %1531 = vmatprep.subr.bf16.mxu0 %v991
    %1532 = vmatpush1.bf16.msra.mxu0 %v990
    %1533 = vmatprep.subr.bf16.mxu0 %v995
    %1534 = vmatpush1.bf16.msra.mxu0 %v994
    %1535 = vmatprep.subr.bf16.mxu0 %v999
    %1536 = vmatpush1.bf16.msra.mxu0 %v998
    %1537 = vmatprep.subr.bf16.mxu0 %v1003
    %1538 = vmatpush1.bf16.msra.mxu0 %v1002
    %1539 = vmatprep.subr.bf16.mxu0 %v1007
    %1540 = vmatpush1.bf16.msra.mxu0 %v1006
    %1541 = vmatprep.subr.bf16.mxu0 %v1011
    %1542 = vmatpush1.bf16.msra.mxu0 %v1010
    %1543 = vmatprep.subr.bf16.mxu0 %v1015
    %1544 = vmatpush1.bf16.msra.mxu0 %v1014
    %1545 = vmatprep.subr.bf16.mxu0 %v1019
    %1546 = vmatpush1.bf16.msra.mxu0 %v1018
    %1547 = vmatprep.subr.bf16.mxu0 %v1023
    %1548 = vmatpush1.bf16.msra.mxu0 %v1022
    %1549 = vmatprep.subr.bf16.mxu0 %v1027
    %1550 = vmatpush1.bf16.msra.mxu0 %v1026
    %1551 = vmatprep.subr.bf16.mxu0 %v1031
    %1552 = vmatpush1.bf16.msra.mxu0 %v1030
    %1553 = vmatprep.subr.bf16.mxu0 %v1035
    %1554 = vmatpush1.bf16.msra.mxu0 %v1034
    %1555 = vmatprep.subr.bf16.mxu0 %v1039
    %1556 = vmatpush1.bf16.msra.mxu0 %v1038
    %1557 = vmatprep.subr.bf16.mxu0 %v1043
    %1558 = vmatpush1.bf16.msra.mxu0 %v1042
    %1559 = vmatprep.mubr.bf16.mxu0 %v106
    %1560 = vmatmul.mubr.bf16.gmra.mrb[0].mxu0 %v105
    %v1561 = vpop.f32.mrb[0].mxu0
    %v1562 = vadd.f32 %v1519, %v1561
    %v1563 = vpop.f32.mrb[0].mxu0
    %v1564 = vadd.f32 %v1521, %v1563
    %v1565 = vpop.f32.mrb[0].mxu0
    %v1566 = vadd.f32 %v1523, %v1565
    %v1567 = vpop.f32.mrb[0].mxu0
    %v1568 = vadd.f32 %v1525, %v1567
    %1569 = vdwg.mxu0
    %1570 = vmatprep.subr.bf16.mxu0 %v1047
    %1571 = vmatpush1.bf16.msra.mxu0 %v1046
    %1572 = vmatprep.subr.bf16.mxu0 %v1051
    %1573 = vmatpush1.bf16.msra.mxu0 %v1050
    %1574 = vmatprep.subr.bf16.mxu0 %v1055
    %1575 = vmatpush1.bf16.msra.mxu0 %v1054
    %1576 = vmatprep.subr.bf16.mxu0 %v1059
    %1577 = vmatpush1.bf16.msra.mxu0 %v1058
    %1578 = vmatprep.subr.bf16.mxu0 %v1063
    %1579 = vmatpush1.bf16.msra.mxu0 %v1062
    %1580 = vmatprep.subr.bf16.mxu0 %v1067
    %1581 = vmatpush1.bf16.msra.mxu0 %v1066
    %1582 = vmatprep.subr.bf16.mxu0 %v1071
    %1583 = vmatpush1.bf16.msra.mxu0 %v1070
    %1584 = vmatprep.subr.bf16.mxu0 %v1075
    %1585 = vmatpush1.bf16.msra.mxu0 %v1074
    %1586 = vmatprep.subr.bf16.mxu0 %v1079
    %1587 = vmatpush1.bf16.msra.mxu0 %v1078
    %1588 = vmatprep.subr.bf16.mxu0 %v1083
    %1589 = vmatpush1.bf16.msra.mxu0 %v1082
    %1590 = vmatprep.subr.bf16.mxu0 %v1087
    %1591 = vmatpush1.bf16.msra.mxu0 %v1086
    %1592 = vmatprep.subr.bf16.mxu0 %v1091
    %1593 = vmatpush1.bf16.msra.mxu0 %v1090
    %1594 = vmatprep.subr.bf16.mxu0 %v1095
    %1595 = vmatpush1.bf16.msra.mxu0 %v1094
    %1596 = vmatprep.subr.bf16.mxu0 %v1099
    %1597 = vmatpush1.bf16.msra.mxu0 %v1098
    %1598 = vmatprep.subr.bf16.mxu0 %v1103
    %1599 = vmatpush1.bf16.msra.mxu0 %v1102
    %1600 = vmatprep.subr.bf16.mxu0 %v1107
    %1601 = vmatpush1.bf16.msra.mxu0 %v1106
    %1602 = vmatprep.mubr.bf16.mxu0 %v108
    %1603 = vmatmul.mubr.bf16.gmra.mrb[0].mxu0 %v107
    %v1604 = vpop.f32.mrb[0].mxu0
    %v1605 = vadd.f32 %v1562, %v1604
    %v1606 = vpop.f32.mrb[0].mxu0
    %v1607 = vadd.f32 %v1564, %v1606
    %v1608 = vpop.f32.mrb[0].mxu0
    %v1609 = vadd.f32 %v1566, %v1608
    %v1610 = vpop.f32.mrb[0].mxu0
    %v1611 = vadd.f32 %v1568, %v1610
    %1612 = vdwg.mxu0
    %1613 = vmatprep.subr.bf16.mxu0 %v1111
    %1614 = vmatpush1.bf16.msra.mxu0 %v1110
    %1615 = vmatprep.subr.bf16.mxu0 0
    %1616 = vmatpush1.bf16.msra.mxu0 0
    %1617 = vmatprep.subr.bf16.mxu0 0
    %1618 = vmatpush1.bf16.msra.mxu0 0
    %1619 = vmatprep.subr.bf16.mxu0 0
    %1620 = vmatpush1.bf16.msra.mxu0 0
    %1621 = vmatprep.subr.bf16.mxu0 0
    %1622 = vmatpush1.bf16.msra.mxu0 0
    %1623 = vmatprep.subr.bf16.mxu0 0
    %1624 = vmatpush1.bf16.msra.mxu0 0
    %1625 = vmatprep.subr.bf16.mxu0 0
    %1626 = vmatpush1.bf16.msra.mxu0 0
    %1627 = vmatprep.subr.bf16.mxu0 0
    %1628 = vmatpush1.bf16.msra.mxu0 0
    %1629 = vmatprep.subr.bf16.mxu0 0
    %1630 = vmatpush1.bf16.msra.mxu0 0
    %1631 = vmatprep.subr.bf16.mxu0 0
    %1632 = vmatpush1.bf16.msra.mxu0 0
    %1633 = vmatprep.subr.bf16.mxu0 0
    %1634 = vmatpush1.bf16.msra.mxu0 0
    %1635 = vmatprep.subr.bf16.mxu0 0
    %1636 = vmatpush1.bf16.msra.mxu0 0
    %1637 = vmatprep.subr.bf16.mxu0 0
    %1638 = vmatpush1.bf16.msra.mxu0 0
    %1639 = vmatprep.subr.bf16.mxu0 0
    %1640 = vmatpush1.bf16.msra.mxu0 0
    %1641 = vmatprep.subr.bf16.mxu0 0
    %1642 = vmatpush1.bf16.msra.mxu0 0
    %1643 = vmatprep.subr.bf16.mxu0 0
    %1644 = vmatpush1.bf16.msra.mxu0 0
    %1645 = vmatprep.mubr.bf16.mxu0 0
    %1646 = vmatmul.mubr.bf16.gmra.mrb[0].mxu0 %v1310
    %v1647 = vpop.f32.mrb[0].mxu0
    %v1648 = vadd.f32 %v1605, %v1647
    %v1649 = vpop.f32.mrb[0].mxu0
    %v1650 = vadd.f32 %v1607, %v1649
    %v1651 = vpop.f32.mrb[0].mxu0
    %v1652 = vadd.f32 %v1609, %v1651
    %v1653 = vpop.f32.mrb[0].mxu0
    %v1654 = vadd.f32 %v1611, %v1653
    %1655 = vdwg.mxu0
    %v1656 = vmax.f32 %v1476, 0.0
    %v1657 = vmax.f32 %v1478, 0.0
    %v1658 = vmax.f32 %v1648, 0.0
    %v1659 = vmax.f32 %v1650, 0.0
    %v1660 = vmax.f32 %v1480, 0.0
    %v1661 = vmax.f32 %v1482, 0.0
    %v1662 = vmax.f32 %v1652, 0.0
    %v1663 = vmax.f32 %v1654, 0.0
    %v1664 = vpack.c.bf16 %v1660, %v1656
    %v1665 = vpack.c.bf16 %v1661, %v1657
    %v1666 = vpack.c.bf16 %v1662, %v1658
    %v1667 = vpack.c.bf16 %v1663, %v1659
    %v1672 = vunpack.c.l.b16 %v1664
    %v1673 = vunpack.c.l.b16 %v1665
    %v1674 = vunpack.c.l.b16 %v1666
    %v1675 = vunpack.c.l.b16 %v1667
    %v1676 = vunpack.c.h.b16 %v1664
    %v1677 = vunpack.c.h.b16 %v1665
    %v1678 = vunpack.c.h.b16 %v1666
    %v1679 = vunpack.c.h.b16 %v1667
    %v1680 = vpack.c.b16 %v1673, %v1672
    %v1681 = vpack.c.b16 %v1675, %v1674
    %v1682 = vpack.c.b16 %v1677, %v1676
    %v1683 = vpack.c.b16 %v1679, %v1678
    %1688 = vst [vmem:[#allocation10] sm:$0xff] %v1680
    %1689 = vst [vmem:[#allocation10 + $0x8] sm:$0xff] %v1681
    %1690 = vst [vmem:[#allocation10 + $0x10] sm:$0xff] %v1682
    %1691 = vst [vmem:[#allocation10 + $0x18] sm:$0xff] %v1683
    %v1692 = vld [vmem:[#allocation7] sm:$0xff]
    %v1693 = vld [vmem:[#allocation7 + $0x8] sm:$0xff]
    %v1694 = vld [vmem:[#allocation7 + $0x10] sm:$0xff]
    %v1695 = vld [vmem:[#allocation7 + $0x18] sm:$0xff]
    %v1696 = vld [vmem:[#allocation7 + $0x20] sm:$0xff]
    %v1697 = vld [vmem:[#allocation7 + $0x28] sm:$0xff]
    %v1698 = vld [vmem:[#allocation7 + $0x30] sm:$0xff]
    %v1699 = vld [vmem:[#allocation7 + $0x38] sm:$0xff]
    %v1700 = vld [vmem:[#allocation7 + $0x40] sm:$0xff]
    %v1701 = vld [vmem:[#allocation7 + $0x48] sm:$0xff]
    %v1702 = vld [vmem:[#allocation7 + $0x50] sm:$0xff]
    %v1703 = vld [vmem:[#allocation7 + $0x58] sm:$0xff]
    %v1704 = vld [vmem:[#allocation7 + $0x60] sm:$0xff]
    %v1705 = vld [vmem:[#allocation7 + $0x68] sm:$0xff]
    %v1706 = vld [vmem:[#allocation7 + $0x70] sm:$0xff]
    %v1707 = vld [vmem:[#allocation7 + $0x78] sm:$0xff]
    %v1708 = vld [vmem:[#allocation7 + $0x80] sm:$0xff]
    %v1709 = vld [vmem:[#allocation7 + $0x88] sm:$0xff]
    %v1710 = vld [vmem:[#allocation7 + $0x90] sm:$0xff]
    %v1711 = vld [vmem:[#allocation7 + $0x98] sm:$0xff]
    %v1712 = vld [vmem:[#allocation7 + $0xa0] sm:$0xff]
    %v1713 = vld [vmem:[#allocation7 + $0xa8] sm:$0xff]
    %v1714 = vld [vmem:[#allocation7 + $0xb0] sm:$0xff]
    %v1715 = vld [vmem:[#allocation7 + $0xb8] sm:$0xff]
    %v1716 = vld [vmem:[#allocation7 + $0xc0] sm:$0xff]
    %v1717 = vld [vmem:[#allocation7 + $0xc8] sm:$0xff]
    %v1718 = vld [vmem:[#allocation7 + $0xd0] sm:$0xff]
    %v1719 = vld [vmem:[#allocation7 + $0xd8] sm:$0xff]
    %v1720 = vld [vmem:[#allocation7 + $0xe0] sm:$0xff]
    %v1721 = vld [vmem:[#allocation7 + $0xe8] sm:$0xff]
    %v1722 = vld [vmem:[#allocation7 + $0xf0] sm:$0xff]
    %v1723 = vld [vmem:[#allocation7 + $0xf8] sm:$0xff]
    %v1724 = vld [vmem:[#allocation7 + $0x100] sm:$0xff]
    %v1725 = vld [vmem:[#allocation7 + $0x108] sm:$0xff]
    %v1726 = vld [vmem:[#allocation7 + $0x110] sm:$0xff]
    %v1727 = vld [vmem:[#allocation7 + $0x118] sm:$0xff]
    %v1728 = vld [vmem:[#allocation7 + $0x120] sm:$0xff]
    %v1729 = vld [vmem:[#allocation7 + $0x128] sm:$0xff]
    %v1730 = vld [vmem:[#allocation7 + $0x130] sm:$0xff]
    %v1731 = vld [vmem:[#allocation7 + $0x138] sm:$0xff]
    %v1732 = vld [vmem:[#allocation7 + $0x140] sm:$0xff]
    %v1733 = vld [vmem:[#allocation7 + $0x148] sm:$0xff]
    %v1734 = vld [vmem:[#allocation7 + $0x150] sm:$0xff]
    %v1735 = vld [vmem:[#allocation7 + $0x158] sm:$0xff]
    %v1736 = vld [vmem:[#allocation7 + $0x160] sm:$0xff]
    %v1737 = vld [vmem:[#allocation7 + $0x168] sm:$0xff]
    %v1738 = vld [vmem:[#allocation7 + $0x170] sm:$0xff]
    %v1739 = vld [vmem:[#allocation7 + $0x178] sm:$0xff]
    %v1740 = vld [vmem:[#allocation7 + $0x180] sm:$0xff]
    %v1741 = vld [vmem:[#allocation7 + $0x188] sm:$0xff]
    %v1742 = vld [vmem:[#allocation7 + $0x190] sm:$0xff]
    %v1743 = vld [vmem:[#allocation7 + $0x198] sm:$0xff]
    %v1744 = vld [vmem:[#allocation7 + $0x1a0] sm:$0xff]
    %v1745 = vld [vmem:[#allocation7 + $0x1a8] sm:$0xff]
    %v1746 = vld [vmem:[#allocation7 + $0x1b0] sm:$0xff]
    %v1747 = vld [vmem:[#allocation7 + $0x1b8] sm:$0xff]
    %v1748 = vld [vmem:[#allocation7 + $0x1c0] sm:$0xff]
    %v1749 = vld [vmem:[#allocation7 + $0x1c8] sm:$0xff]
    %v1750 = vld [vmem:[#allocation7 + $0x1d0] sm:$0xff]
    %v1751 = vld [vmem:[#allocation7 + $0x1d8] sm:$0xff]
    %v1752 = vld [vmem:[#allocation7 + $0x1e0] sm:$0xff]
    %v1753 = vld [vmem:[#allocation7 + $0x1e8] sm:$0xff]
    %v1754 = vld [vmem:[#allocation7 + $0x1f0] sm:$0xff]
    %v1755 = vld [vmem:[#allocation7 + $0x1f8] sm:$0xff]
    %v1756 = vld [vmem:[%s4] sm:$0x3]
    %v1758 = vlaneseq
    %v1759 = vshrl.u32 %v1758, 7
    %v1760 = vsub.s32 0, %v1759
    %v1761 = vrot.slane %v1756, %v1760
    %v1762 = vlaneseq
    %v1763 = vshrl.u32 %v1762, 7
    %v1764 = vsub.s32 1, %v1763
    %v1765 = vrot.slane %v1756, %v1764
    %v1832 = vunpack.c.l.b16 %v1692
    %v1833 = vunpack.c.h.b16 %v1692
    %v1834 = vunpack.c.l.b16 %v1693
    %v1835 = vunpack.c.h.b16 %v1693
    %v1836 = vunpack.c.l.b16 %v1694
    %v1837 = vunpack.c.h.b16 %v1694
    %v1838 = vunpack.c.l.b16 %v1695
    %v1839 = vunpack.c.h.b16 %v1695
    %v1840 = vunpack.c.l.b16 %v1696
    %v1841 = vunpack.c.h.b16 %v1696
    %v1842 = vunpack.c.l.b16 %v1697
    %v1843 = vunpack.c.h.b16 %v1697
    %v1844 = vunpack.c.l.b16 %v1698
    %v1845 = vunpack.c.h.b16 %v1698
    %v1846 = vunpack.c.l.b16 %v1699
    %v1847 = vunpack.c.h.b16 %v1699
    %v1848 = vunpack.c.l.b16 %v1700
    %v1849 = vunpack.c.h.b16 %v1700
    %v1850 = vunpack.c.l.b16 %v1701
    %v1851 = vunpack.c.h.b16 %v1701
    %v1852 = vunpack.c.l.b16 %v1702
    %v1853 = vunpack.c.h.b16 %v1702
    %v1854 = vunpack.c.l.b16 %v1703
    %v1855 = vunpack.c.h.b16 %v1703
    %v1856 = vunpack.c.l.b16 %v1704
    %v1857 = vunpack.c.h.b16 %v1704
    %v1858 = vunpack.c.l.b16 %v1705
    %v1859 = vunpack.c.h.b16 %v1705
    %v1860 = vunpack.c.l.b16 %v1706
    %v1861 = vunpack.c.h.b16 %v1706
    %v1862 = vunpack.c.l.b16 %v1707
    %v1863 = vunpack.c.h.b16 %v1707
    %v1864 = vunpack.c.l.b16 %v1708
    %v1865 = vunpack.c.h.b16 %v1708
    %v1866 = vunpack.c.l.b16 %v1709
    %v1867 = vunpack.c.h.b16 %v1709
    %v1868 = vunpack.c.l.b16 %v1710
    %v1869 = vunpack.c.h.b16 %v1710
    %v1870 = vunpack.c.l.b16 %v1711
    %v1871 = vunpack.c.h.b16 %v1711
    %v1872 = vunpack.c.l.b16 %v1712
    %v1873 = vunpack.c.h.b16 %v1712
    %v1874 = vunpack.c.l.b16 %v1713
    %v1875 = vunpack.c.h.b16 %v1713
    %v1876 = vunpack.c.l.b16 %v1714
    %v1877 = vunpack.c.h.b16 %v1714
    %v1878 = vunpack.c.l.b16 %v1715
    %v1879 = vunpack.c.h.b16 %v1715
    %v1880 = vunpack.c.l.b16 %v1716
    %v1881 = vunpack.c.h.b16 %v1716
    %v1882 = vunpack.c.l.b16 %v1717
    %v1883 = vunpack.c.h.b16 %v1717
    %v1884 = vunpack.c.l.b16 %v1718
    %v1885 = vunpack.c.h.b16 %v1718
    %v1886 = vunpack.c.l.b16 %v1719
    %v1887 = vunpack.c.h.b16 %v1719
    %v1888 = vunpack.c.l.b16 %v1720
    %v1889 = vunpack.c.h.b16 %v1720
    %v1890 = vunpack.c.l.b16 %v1721
    %v1891 = vunpack.c.h.b16 %v1721
    %v1892 = vunpack.c.l.b16 %v1722
    %v1893 = vunpack.c.h.b16 %v1722
    %v1894 = vunpack.c.l.b16 %v1723
    %v1895 = vunpack.c.h.b16 %v1723
    %v1896 = vunpack.c.l.b16 %v1724
    %v1897 = vunpack.c.h.b16 %v1724
    %v1898 = vunpack.c.l.b16 %v1725
    %v1899 = vunpack.c.h.b16 %v1725
    %v1900 = vunpack.c.l.b16 %v1726
    %v1901 = vunpack.c.h.b16 %v1726
    %v1902 = vunpack.c.l.b16 %v1727
    %v1903 = vunpack.c.h.b16 %v1727
    %v1904 = vunpack.c.l.b16 %v1728
    %v1905 = vunpack.c.h.b16 %v1728
    %v1906 = vunpack.c.l.b16 %v1729
    %v1907 = vunpack.c.h.b16 %v1729
    %v1908 = vunpack.c.l.b16 %v1730
    %v1909 = vunpack.c.h.b16 %v1730
    %v1910 = vunpack.c.l.b16 %v1731
    %v1911 = vunpack.c.h.b16 %v1731
    %v1912 = vunpack.c.l.b16 %v1732
    %v1913 = vunpack.c.h.b16 %v1732
    %v1914 = vunpack.c.l.b16 %v1733
    %v1915 = vunpack.c.h.b16 %v1733
    %v1916 = vunpack.c.l.b16 %v1734
    %v1917 = vunpack.c.h.b16 %v1734
    %v1918 = vunpack.c.l.b16 %v1735
    %v1919 = vunpack.c.h.b16 %v1735
    %v1920 = vunpack.c.l.b16 %v1736
    %v1921 = vunpack.c.h.b16 %v1736
    %v1922 = vunpack.c.l.b16 %v1737
    %v1923 = vunpack.c.h.b16 %v1737
    %v1924 = vunpack.c.l.b16 %v1738
    %v1925 = vunpack.c.h.b16 %v1738
    %v1926 = vunpack.c.l.b16 %v1739
    %v1927 = vunpack.c.h.b16 %v1739
    %v1928 = vunpack.c.l.b16 %v1740
    %v1929 = vunpack.c.h.b16 %v1740
    %v1930 = vunpack.c.l.b16 %v1741
    %v1931 = vunpack.c.h.b16 %v1741
    %v1932 = vunpack.c.l.b16 %v1742
    %v1933 = vunpack.c.h.b16 %v1742
    %v1934 = vunpack.c.l.b16 %v1743
    %v1935 = vunpack.c.h.b16 %v1743
    %v1936 = vunpack.c.l.b16 %v1744
    %v1937 = vunpack.c.h.b16 %v1744
    %v1938 = vunpack.c.l.b16 %v1745
    %v1939 = vunpack.c.h.b16 %v1745
    %v1940 = vunpack.c.l.b16 %v1746
    %v1941 = vunpack.c.h.b16 %v1746
    %v1942 = vunpack.c.l.b16 %v1747
    %v1943 = vunpack.c.h.b16 %v1747
    %v1944 = vunpack.c.l.b16 %v1748
    %v1945 = vunpack.c.h.b16 %v1748
    %v1946 = vunpack.c.l.b16 %v1749
    %v1947 = vunpack.c.h.b16 %v1749
    %v1948 = vunpack.c.l.b16 %v1750
    %v1949 = vunpack.c.h.b16 %v1750
    %v1950 = vunpack.c.l.b16 %v1751
    %v1951 = vunpack.c.h.b16 %v1751
    %v1952 = vunpack.c.l.b16 %v1752
    %v1953 = vunpack.c.h.b16 %v1752
    %v1954 = vunpack.c.l.b16 %v1753
    %v1955 = vunpack.c.h.b16 %v1753
    %v1956 = vunpack.c.l.b16 %v1754
    %v1957 = vunpack.c.h.b16 %v1754
    %v1958 = vunpack.c.l.b16 %v1755
    %v1959 = vunpack.c.h.b16 %v1755
    %v1960 = vpack.c.b16 %v1834, %v1832
    %v1961 = vpack.c.b16 %v1835, %v1833
    %v1962 = vpack.c.b16 %v1838, %v1836
    %v1963 = vpack.c.b16 %v1839, %v1837
    %v1964 = vpack.c.b16 %v1842, %v1840
    %v1965 = vpack.c.b16 %v1843, %v1841
    %v1966 = vpack.c.b16 %v1846, %v1844
    %v1967 = vpack.c.b16 %v1847, %v1845
    %v1968 = vpack.c.b16 %v1850, %v1848
    %v1969 = vpack.c.b16 %v1851, %v1849
    %v1970 = vpack.c.b16 %v1854, %v1852
    %v1971 = vpack.c.b16 %v1855, %v1853
    %v1972 = vpack.c.b16 %v1858, %v1856
    %v1973 = vpack.c.b16 %v1859, %v1857
    %v1974 = vpack.c.b16 %v1862, %v1860
    %v1975 = vpack.c.b16 %v1863, %v1861
    %v1976 = vpack.c.b16 %v1866, %v1864
    %v1977 = vpack.c.b16 %v1867, %v1865
    %v1978 = vpack.c.b16 %v1870, %v1868
    %v1979 = vpack.c.b16 %v1871, %v1869
    %v1980 = vpack.c.b16 %v1874, %v1872
    %v1981 = vpack.c.b16 %v1875, %v1873
    %v1982 = vpack.c.b16 %v1878, %v1876
    %v1983 = vpack.c.b16 %v1879, %v1877
    %v1984 = vpack.c.b16 %v1882, %v1880
    %v1985 = vpack.c.b16 %v1883, %v1881
    %v1986 = vpack.c.b16 %v1886, %v1884
    %v1987 = vpack.c.b16 %v1887, %v1885
    %v1988 = vpack.c.b16 %v1890, %v1888
    %v1989 = vpack.c.b16 %v1891, %v1889
    %v1990 = vpack.c.b16 %v1894, %v1892
    %v1991 = vpack.c.b16 %v1895, %v1893
    %v1992 = vpack.c.b16 %v1898, %v1896
    %v1993 = vpack.c.b16 %v1899, %v1897
    %v1994 = vpack.c.b16 %v1902, %v1900
    %v1995 = vpack.c.b16 %v1903, %v1901
    %v1996 = vpack.c.b16 %v1906, %v1904
    %v1997 = vpack.c.b16 %v1907, %v1905
    %v1998 = vpack.c.b16 %v1910, %v1908
    %v1999 = vpack.c.b16 %v1911, %v1909
    %v2000 = vpack.c.b16 %v1914, %v1912
    %v2001 = vpack.c.b16 %v1915, %v1913
    %v2002 = vpack.c.b16 %v1918, %v1916
    %v2003 = vpack.c.b16 %v1919, %v1917
    %v2004 = vpack.c.b16 %v1922, %v1920
    %v2005 = vpack.c.b16 %v1923, %v1921
    %v2006 = vpack.c.b16 %v1926, %v1924
    %v2007 = vpack.c.b16 %v1927, %v1925
    %v2008 = vpack.c.b16 %v1930, %v1928
    %v2009 = vpack.c.b16 %v1931, %v1929
    %v2010 = vpack.c.b16 %v1934, %v1932
    %v2011 = vpack.c.b16 %v1935, %v1933
    %v2012 = vpack.c.b16 %v1938, %v1936
    %v2013 = vpack.c.b16 %v1939, %v1937
    %v2014 = vpack.c.b16 %v1942, %v1940
    %v2015 = vpack.c.b16 %v1943, %v1941
    %v2016 = vpack.c.b16 %v1946, %v1944
    %v2017 = vpack.c.b16 %v1947, %v1945
    %v2018 = vpack.c.b16 %v1950, %v1948
    %v2019 = vpack.c.b16 %v1951, %v1949
    %v2020 = vpack.c.b16 %v1954, %v1952
    %v2021 = vpack.c.b16 %v1955, %v1953
    %v2022 = vpack.c.b16 %v1958, %v1956
    %v2023 = vpack.c.b16 %v1959, %v1957
    %2088 = vmatprep.subr.bf16.mxu0 %v1961
    %2089 = vmatpush1.bf16.msra.mxu0 %v1960
    %2090 = vmatprep.subr.bf16.mxu0 %v1963
    %2091 = vmatpush1.bf16.msra.mxu0 %v1962
    %2092 = vmatprep.subr.bf16.mxu0 %v1965
    %2093 = vmatpush1.bf16.msra.mxu0 %v1964
    %2094 = vmatprep.subr.bf16.mxu0 %v1967
    %2095 = vmatpush1.bf16.msra.mxu0 %v1966
    %2096 = vmatprep.subr.bf16.mxu0 %v1969
    %2097 = vmatpush1.bf16.msra.mxu0 %v1968
    %2098 = vmatprep.subr.bf16.mxu0 %v1971
    %2099 = vmatpush1.bf16.msra.mxu0 %v1970
    %2100 = vmatprep.subr.bf16.mxu0 %v1973
    %2101 = vmatpush1.bf16.msra.mxu0 %v1972
    %2102 = vmatprep.subr.bf16.mxu0 %v1975
    %2103 = vmatpush1.bf16.msra.mxu0 %v1974
    %2104 = vmatprep.subr.bf16.mxu0 %v1977
    %2105 = vmatpush1.bf16.msra.mxu0 %v1976
    %2106 = vmatprep.subr.bf16.mxu0 %v1979
    %2107 = vmatpush1.bf16.msra.mxu0 %v1978
    %2108 = vmatprep.subr.bf16.mxu0 %v1981
    %2109 = vmatpush1.bf16.msra.mxu0 %v1980
    %2110 = vmatprep.subr.bf16.mxu0 %v1983
    %2111 = vmatpush1.bf16.msra.mxu0 %v1982
    %2112 = vmatprep.subr.bf16.mxu0 %v1985
    %2113 = vmatpush1.bf16.msra.mxu0 %v1984
    %2114 = vmatprep.subr.bf16.mxu0 %v1987
    %2115 = vmatpush1.bf16.msra.mxu0 %v1986
    %2116 = vmatprep.subr.bf16.mxu0 %v1989
    %2117 = vmatpush1.bf16.msra.mxu0 %v1988
    %2118 = vmatprep.subr.bf16.mxu0 %v1991
    %2119 = vmatpush1.bf16.msra.mxu0 %v1990
    %2120 = vmatprep.mubr.bf16.mxu0 %v1665
    %2121 = vmatmul.mubr.bf16.gmra.mrb[0].mxu0 %v1664
    %v2122 = vpop.f32.mrb[0].mxu0
    %v2123 = vadd.f32 %v1761, %v2122
    %v2124 = vpop.f32.mrb[0].mxu0
    %v2125 = vadd.f32 %v1765, %v2124
    %v2126 = vpop.f32.mrb[0].mxu0
    %v2127 = vadd.f32 %v1761, %v2126
    %v2128 = vpop.f32.mrb[0].mxu0
    %v2129 = vadd.f32 %v1765, %v2128
    %2130 = vdwg.mxu0
    %2131 = vmatprep.subr.bf16.mxu0 %v1993
    %2132 = vmatpush1.bf16.msra.mxu0 %v1992
    %2133 = vmatprep.subr.bf16.mxu0 %v1995
    %2134 = vmatpush1.bf16.msra.mxu0 %v1994
    %2135 = vmatprep.subr.bf16.mxu0 %v1997
    %2136 = vmatpush1.bf16.msra.mxu0 %v1996
    %2137 = vmatprep.subr.bf16.mxu0 %v1999
    %2138 = vmatpush1.bf16.msra.mxu0 %v1998
    %2139 = vmatprep.subr.bf16.mxu0 %v2001
    %2140 = vmatpush1.bf16.msra.mxu0 %v2000
    %2141 = vmatprep.subr.bf16.mxu0 %v2003
    %2142 = vmatpush1.bf16.msra.mxu0 %v2002
    %2143 = vmatprep.subr.bf16.mxu0 %v2005
    %2144 = vmatpush1.bf16.msra.mxu0 %v2004
    %2145 = vmatprep.subr.bf16.mxu0 %v2007
    %2146 = vmatpush1.bf16.msra.mxu0 %v2006
    %2147 = vmatprep.subr.bf16.mxu0 %v2009
    %2148 = vmatpush1.bf16.msra.mxu0 %v2008
    %2149 = vmatprep.subr.bf16.mxu0 %v2011
    %2150 = vmatpush1.bf16.msra.mxu0 %v2010
    %2151 = vmatprep.subr.bf16.mxu0 %v2013
    %2152 = vmatpush1.bf16.msra.mxu0 %v2012
    %2153 = vmatprep.subr.bf16.mxu0 %v2015
    %2154 = vmatpush1.bf16.msra.mxu0 %v2014
    %2155 = vmatprep.subr.bf16.mxu0 %v2017
    %2156 = vmatpush1.bf16.msra.mxu0 %v2016
    %2157 = vmatprep.subr.bf16.mxu0 %v2019
    %2158 = vmatpush1.bf16.msra.mxu0 %v2018
    %2159 = vmatprep.subr.bf16.mxu0 %v2021
    %2160 = vmatpush1.bf16.msra.mxu0 %v2020
    %2161 = vmatprep.subr.bf16.mxu0 %v2023
    %2162 = vmatpush1.bf16.msra.mxu0 %v2022
    %2163 = vmatprep.mubr.bf16.mxu0 %v1667
    %2164 = vmatmul.mubr.bf16.gmra.mrb[0].mxu0 %v1666
    %v2165 = vpop.f32.mrb[0].mxu0
    %v2166 = vadd.f32 %v2123, %v2165
    %v2167 = vpop.f32.mrb[0].mxu0
    %v2168 = vadd.f32 %v2125, %v2167
    %v2169 = vpop.f32.mrb[0].mxu0
    %v2170 = vadd.f32 %v2127, %v2169
    %v2171 = vpop.f32.mrb[0].mxu0
    %v2172 = vadd.f32 %v2129, %v2171
    %2173 = vdwg.mxu0
    %v2174 = vmax.f32 %v2166, 0.0
    %v2175 = vmax.f32 %v2168, 0.0
    %v2176 = vmax.f32 %v2170, 0.0
    %v2177 = vmax.f32 %v2172, 0.0
    %v2178 = vpack.c.bf16 %v2176, %v2174
    %v2179 = vpack.c.bf16 %v2177, %v2175
    %v2182 = vunpack.c.l.b16 %v2178
    %v2183 = vunpack.c.l.b16 %v2179
    %v2184 = vunpack.c.h.b16 %v2178
    %v2185 = vunpack.c.h.b16 %v2179
    %v2186 = vpack.c.b16 %v2183, %v2182
    %v2187 = vpack.c.b16 %v2185, %v2184
    %2190 = vst [vmem:[#allocation11] sm:$0xff] %v2186
    %2191 = vst [vmem:[#allocation11 + $0x8] sm:$0xff] %v2187
    %v2192 = vld [vmem:[#allocation8] sm:$0xf]
    %v2193 = vld [vmem:[#allocation8 + $0x4] sm:$0xf]
    %v2194 = vld [vmem:[#allocation8 + $0x8] sm:$0xf]
    %v2195 = vld [vmem:[#allocation8 + $0xc] sm:$0xf]
    %v2196 = vld [vmem:[#allocation8 + $0x10] sm:$0xf]
    %v2197 = vld [vmem:[#allocation8 + $0x14] sm:$0xf]
    %v2198 = vld [vmem:[#allocation8 + $0x18] sm:$0xf]
    %v2199 = vld [vmem:[#allocation8 + $0x1c] sm:$0xf]
    %v2200 = vld [vmem:[#allocation8 + $0x20] sm:$0xf]
    %v2201 = vld [vmem:[#allocation8 + $0x24] sm:$0xf]
    %v2202 = vld [vmem:[#allocation8 + $0x28] sm:$0xf]
    %v2203 = vld [vmem:[#allocation8 + $0x2c] sm:$0xf]
    %v2204 = vld [vmem:[#allocation8 + $0x30] sm:$0xf]
    %v2205 = vld [vmem:[#allocation8 + $0x34] sm:$0xf]
    %v2206 = vld [vmem:[#allocation8 + $0x38] sm:$0xf]
    %v2207 = vld [vmem:[#allocation8 + $0x3c] sm:$0xf]
    %v2208 = vld [vmem:[#allocation8 + $0x40] sm:$0xf]
    %v2209 = vld [vmem:[#allocation8 + $0x44] sm:$0xf]
    %v2210 = vld [vmem:[#allocation8 + $0x48] sm:$0xf]
    %v2211 = vld [vmem:[#allocation8 + $0x4c] sm:$0xf]
    %v2212 = vld [vmem:[#allocation8 + $0x50] sm:$0xf]
    %v2213 = vld [vmem:[#allocation8 + $0x54] sm:$0xf]
    %v2214 = vld [vmem:[#allocation8 + $0x58] sm:$0xf]
    %v2215 = vld [vmem:[#allocation8 + $0x5c] sm:$0xf]
    %v2216 = vld [vmem:[#allocation8 + $0x60] sm:$0xf]
    %v2217 = vld [vmem:[#allocation8 + $0x64] sm:$0xf]
    %v2218 = vld [vmem:[#allocation8 + $0x68] sm:$0xf]
    %v2219 = vld [vmem:[#allocation8 + $0x6c] sm:$0xf]
    %v2220 = vld [vmem:[#allocation8 + $0x70] sm:$0xf]
    %v2221 = vld [vmem:[#allocation8 + $0x74] sm:$0xf]
    %v2222 = vld [vmem:[#allocation8 + $0x78] sm:$0xf]
    %v2223 = vld [vmem:[#allocation8 + $0x7c] sm:$0xf]
    %v2224 = vld [vmem:[%s6] sm:$0x1]
    %v2226 = vlaneseq
    %v2227 = vshrl.u32 %v2226, 7
    %v2228 = vsub.s32 0, %v2227
    %v2229 = vrot.slane %v2224, %v2228
    %v2263 = vunpack.c.l.b16 %v2192
    %v2264 = vunpack.c.l.b16 %v2193
    %v2265 = vunpack.c.l.b16 %v2194
    %v2266 = vunpack.c.l.b16 %v2195
    %v2267 = vunpack.c.l.b16 %v2196
    %v2268 = vunpack.c.l.b16 %v2197
    %v2269 = vunpack.c.l.b16 %v2198
    %v2270 = vunpack.c.l.b16 %v2199
    %v2271 = vunpack.c.l.b16 %v2200
    %v2272 = vunpack.c.l.b16 %v2201
    %v2273 = vunpack.c.l.b16 %v2202
    %v2274 = vunpack.c.l.b16 %v2203
    %v2275 = vunpack.c.l.b16 %v2204
    %v2276 = vunpack.c.l.b16 %v2205
    %v2277 = vunpack.c.l.b16 %v2206
    %v2278 = vunpack.c.l.b16 %v2207
    %v2279 = vunpack.c.l.b16 %v2208
    %v2280 = vunpack.c.l.b16 %v2209
    %v2281 = vunpack.c.l.b16 %v2210
    %v2282 = vunpack.c.l.b16 %v2211
    %v2283 = vunpack.c.l.b16 %v2212
    %v2284 = vunpack.c.l.b16 %v2213
    %v2285 = vunpack.c.l.b16 %v2214
    %v2286 = vunpack.c.l.b16 %v2215
    %v2287 = vunpack.c.l.b16 %v2216
    %v2288 = vunpack.c.l.b16 %v2217
    %v2289 = vunpack.c.l.b16 %v2218
    %v2290 = vunpack.c.l.b16 %v2219
    %v2291 = vunpack.c.l.b16 %v2220
    %v2292 = vunpack.c.l.b16 %v2221
    %v2293 = vunpack.c.l.b16 %v2222
    %v2294 = vunpack.c.l.b16 %v2223
    %v2295 = vpack.c.b16 %v2264, %v2263
    %v2296 = vpack.c.b16 %v2266, %v2265
    %v2297 = vpack.c.b16 %v2268, %v2267
    %v2298 = vpack.c.b16 %v2270, %v2269
    %v2299 = vpack.c.b16 %v2272, %v2271
    %v2300 = vpack.c.b16 %v2274, %v2273
    %v2301 = vpack.c.b16 %v2276, %v2275
    %v2302 = vpack.c.b16 %v2278, %v2277
    %v2303 = vpack.c.b16 %v2280, %v2279
    %v2304 = vpack.c.b16 %v2282, %v2281
    %v2305 = vpack.c.b16 %v2284, %v2283
    %v2306 = vpack.c.b16 %v2286, %v2285
    %v2307 = vpack.c.b16 %v2288, %v2287
    %v2308 = vpack.c.b16 %v2290, %v2289
    %v2309 = vpack.c.b16 %v2292, %v2291
    %v2310 = vpack.c.b16 %v2294, %v2293
    %2327 = vmatprep.subr.bf16.mxu0 0
    %2328 = vmatpush1.bf16.msra.mxu0 %v2295
    %2329 = vmatprep.subr.bf16.mxu0 0
    %2330 = vmatpush1.bf16.msra.mxu0 %v2296
    %2331 = vmatprep.subr.bf16.mxu0 0
    %2332 = vmatpush1.bf16.msra.mxu0 %v2297
    %2333 = vmatprep.subr.bf16.mxu0 0
    %2334 = vmatpush1.bf16.msra.mxu0 %v2298
    %2335 = vmatprep.subr.bf16.mxu0 0
    %2336 = vmatpush1.bf16.msra.mxu0 %v2299
    %2337 = vmatprep.subr.bf16.mxu0 0
    %2338 = vmatpush1.bf16.msra.mxu0 %v2300
    %2339 = vmatprep.subr.bf16.mxu0 0
    %2340 = vmatpush1.bf16.msra.mxu0 %v2301
    %2341 = vmatprep.subr.bf16.mxu0 0
    %2342 = vmatpush1.bf16.msra.mxu0 %v2302
    %2343 = vmatprep.subr.bf16.mxu0 0
    %2344 = vmatpush1.bf16.msra.mxu0 %v2303
    %2345 = vmatprep.subr.bf16.mxu0 0
    %2346 = vmatpush1.bf16.msra.mxu0 %v2304
    %2347 = vmatprep.subr.bf16.mxu0 0
    %2348 = vmatpush1.bf16.msra.mxu0 %v2305
    %2349 = vmatprep.subr.bf16.mxu0 0
    %2350 = vmatpush1.bf16.msra.mxu0 %v2306
    %2351 = vmatprep.subr.bf16.mxu0 0
    %2352 = vmatpush1.bf16.msra.mxu0 %v2307
    %2353 = vmatprep.subr.bf16.mxu0 0
    %2354 = vmatpush1.bf16.msra.mxu0 %v2308
    %2355 = vmatprep.subr.bf16.mxu0 0
    %2356 = vmatpush1.bf16.msra.mxu0 %v2309
    %2357 = vmatprep.subr.bf16.mxu0 0
    %2358 = vmatpush1.bf16.msra.mxu0 %v2310
    %2359 = vmatprep.mubr.bf16.mxu0 %v2179
    %2360 = vmatmul.mubr.bf16.gmra.mrb[0].mxu0 %v2178
    %v2361 = vpop.f32.mrb[0].mxu0
    %v2362 = vadd.f32 %v2229, %v2361
    %v2363 = vpop.f32.mrb[0].mxu0
    %v2364 = vpop.f32.mrb[0].mxu0
    %v2365 = vadd.f32 %v2229, %v2364
    %v2366 = vpop.f32.mrb[0].mxu0
    %2367 = vdwg.mxu0
    %v2368 = vmax.f32 %v2362, 0.0
    %v2369 = vmax.f32 %v2365, 0.0
    %v2370 = vpack.c.bf16 %v2369, %v2368
    %v2372 = vunpack.c.l.b16 %v2370
    %v2373 = vunpack.c.h.b16 %v2370
    %v2374 = vpack.c.b16 %v2372, %v2372
    %v2375 = vpack.c.b16 %v2373, %v2373
    %2378 = vst [vmem:[#allocation13] sm:$0xf] %v2374
    %2379 = vst [vmem:[#allocation13 + $0x4] sm:$0xf] %v2375
    %v2380 = vlaneseq
    %v2381 = vand.u32 %v2380, 127
    %vm2382 = vcmp.lt.s32.totalorder %v2381, 10
    %v2383 = vsel %vm2382, %v2368, -inf
    %v2384 = vsel %vm2382, %v2369, -inf
    %2385 = vmax.xlane.f32.xlu0 %v2383
    %v2386 = vpop.xlane.xlu0 %2385
    %2387 = vmax.xlane.f32.xlu0 %v2384
    %v2388 = vpop.xlane.xlu0 %2387
    %v2389 = vsub.f32 %v2383, %v2386
    %v2390 = vsub.f32 %v2384, %v2388
    %v2391 = vmul.f32 %v2389, 1.442695
    %v2392 = vpow.pop %v2391
    %v2393 = vmul.f32 %v2390, 1.442695
    %v2394 = vpow.pop %v2393
    %2395 = vadd.xlane.f32.xlu0 %v2392
    %v2396 = vpop.xlane.xlu0 %2395
    %2397 = vadd.xlane.f32.xlu0 %v2394
    %v2398 = vpop.xlane.xlu0 %2397
    %v2399 = vrcp.pop %v2396
    %v2400 = vmul.f32 %v2392, %v2399
    %v2401 = vrcp.pop %v2398
    %v2402 = vmul.f32 %v2394, %v2401
    %2403 = vst [vmem:[#allocation14] sm:$0xff] %v2400
    %2404 = vst [vmem:[#allocation14 + $0x8] sm:$0xff] %v2402
    // Predicated region
    $region46: #{tpu_custom_call.1} parent=1 // pred_check
      _
    $region47: #{tpu_custom_call.1} parent=1 // pred_check_branch
      %2406 = sbr.rel (0) target = $region49
    $region48: #{tpu_custom_call.1} parent=1 // pred_region
      %s2408 = ssub.s32 512, 512
      %2409 = vsyncadd [#allocation4], %s2408
      %s2410 = sshll.u32 [#allocation10], 4
      %s2411 = int_to_ptr.vmem [resolvable:$true] %s2410
      %2416 = dma.vmem_to_hbm [thread:$0]  %s2411, 512, %s7, [#allocation4], 256, 256, 16
    $region49: #{tpu_custom_call.1} parent=1 // pred_fallthru
      _
    // Predicated region
    $region50: #{tpu_custom_call.1} parent=1 // pred_check
      _
    $region51: #{tpu_custom_call.1} parent=1 // pred_check_branch
      %2418 = sbr.rel (0) target = $region53
    $region52: #{tpu_custom_call.1} parent=1 // pred_region
      %s2420 = ssub.s32 256, 256
      %2421 = vsyncadd [#allocation12], %s2420
      %s2422 = sshll.u32 [#allocation11], 4
      %s2423 = int_to_ptr.vmem [resolvable:$true] %s2422
      %2428 = dma.vmem_to_hbm [thread:$0]  %s2423, 256, %s8, [#allocation12], 128, 128, 8
    $region53: #{tpu_custom_call.1} parent=1 // pred_fallthru
      _
    // Predicated region
    $region54: #{tpu_custom_call.1} parent=1 // pred_check
      _
    $region55: #{tpu_custom_call.1} parent=1 // pred_check_branch
      %2430 = sbr.rel (0) target = $region57
    $region56: #{tpu_custom_call.1} parent=1 // pred_region
      %s2432 = ssub.s32 128, 128
      %2433 = vsyncadd [#allocation12], %s2432
      %s2434 = sshll.u32 [#allocation13], 4
      %s2435 = int_to_ptr.vmem [resolvable:$true] %s2434
      %2440 = dma.vmem_to_hbm [thread:$0]  %s2435, 128, %s9, [#allocation12], 64, 64, 4
    $region57: #{tpu_custom_call.1} parent=1 // pred_fallthru
      _
    // Predicated region
    $region58: #{tpu_custom_call.1} parent=1 // pred_check
      _
    $region59: #{tpu_custom_call.1} parent=1 // pred_check_branch
      %2442 = sbr.rel (0) target = $region61
    $region60: #{tpu_custom_call.1} parent=1 // pred_region
      %s2444 = ssub.s32 256, 256
      %2445 = vsyncadd [#allocation15], %s2444
      %s2446 = sshll.u32 [#allocation14], 4
      %s2447 = int_to_ptr.vmem [resolvable:$true] %s2446
      %2452 = dma.vmem_to_hbm [thread:$0]  %s2447, 256, %s10, [#allocation15], 128, 128, 8
    $region61: #{tpu_custom_call.1} parent=1 // pred_fallthru
      _
    // Predicated region
    $region62: #{tpu_custom_call.1} parent=1 // pred_check
      _
    $region63: #{tpu_custom_call.1} parent=1 // pred_check_branch
      %2454 = sbr.rel (0) target = $region65
    $region64: #{tpu_custom_call.1} parent=1 // pred_region
      %2455 = dma.done [#allocation4], 512
    $region65: #{tpu_custom_call.1} parent=1 // pred_fallthru
      _
    // Predicated region
    $region66: #{tpu_custom_call.1} parent=1 // pred_check
      _
    $region67: #{tpu_custom_call.1} parent=1 // pred_check_branch
      %2457 = sbr.rel (0) target = $region69
    $region68: #{tpu_custom_call.1} parent=1 // pred_region
      %2458 = dma.done [#allocation12], 256
    $region69: #{tpu_custom_call.1} parent=1 // pred_fallthru
      _
    // Predicated region
    $region70: #{tpu_custom_call.1} parent=1 // pred_check
      _
    $region71: #{tpu_custom_call.1} parent=1 // pred_check_branch
      %2460 = sbr.rel (0) target = $region73
    $region72: #{tpu_custom_call.1} parent=1 // pred_region
      %2461 = dma.done [#allocation12], 128
    $region73: #{tpu_custom_call.1} parent=1 // pred_fallthru
      _
    // Predicated region
    $region74: #{tpu_custom_call.1} parent=1 // pred_check
      _
    $region75: #{tpu_custom_call.1} parent=1 // pred_check_branch
      %2463 = sbr.rel (0) target = $region77
    $region76: #{tpu_custom_call.1} parent=1 // pred_region
      %2464 = dma.done [#allocation15], 256
    $region77: #{tpu_custom_call.1} parent=1 // pred_fallthru
      _
    %2465 = vsyncpa [#allocation3], 1
    %2466 = vsyncpa [#allocation6], 1
    %2467 = vsyncpa [#allocation9], 1
    %2468 = vsyncpa [#allocation4], 1
    %2469 = vsyncpa [#allocation12], 1
    %2470 = vsyncpa [#allocation15], 1

</llo_original>
